<compile_context>
chip_gen: v6e
topology: v6e:2x2x1
jax: 0.10.0
libtpu: 0.0.40
codegen_flags: <defaults>
</compile_context>

<pallas_src>
import jax
import jax.numpy as jnp
import numpy as np
from jax.experimental import pallas as pl
from jax.experimental.pallas import tpu as pltpu

GATE_PAD = 128   # each GRU gate padded to its own 128-lane tile
HEAD_PAD = 128   # classifier head width padded from 100 to 128 (lane-dense)


def gru_mod_kernel(x_ref,        # (B, T, I)      f32  batch-first input
                   w_ih_ref,     # (I, 3*128)     f32  gates [r | z | n], per-gate 128-lane tiles
                   w_hh_ref,     # (128, 3*128)   f32  rows 32:128 zero (h is lane-padded)
                   b_x_ref,      # (1, 3*128)     f32  [b_ir+b_hr | b_iz+b_hz | b_in], zero-padded
                   b_hn_ref,     # (1, 128)       f32  b_hn (stays inside r * (h@W_hn + b_hn))
                   w1_ref,       # (128, 128)     f32  head layer 1 (zero-padded rows/cols)
                   b1_ref,       # (1, 128)       f32
                   w1b_ref,      # (128, 128)     f32  head layer 1bis (zero-padded rows/cols)
                   b1b_ref,      # (1, 128)       f32
                   w2_ref,       # (128, 128)     f32  head layer 2 (only col 0 meaningful)
                   b2_ref,       # (1, 128)       f32
                   out_ref):     # (B, 128)       f32  lane-dense; col 0 is the prediction
    B, T, I = x_ref.shape
    G = GATE_PAD

    # ---- hoisted input projection: one MXU pass for all (b, t) pairs ----
    x_all = x_ref[...].reshape(B * T, I)                                  # row = b*T + t
    xp = jnp.dot(x_all, w_ih_ref[...],
                 preferred_element_type=jnp.float32) + b_x_ref[...]       # (B*T, 3G)

    w_hh = w_hh_ref[...]
    b_hn = b_hn_ref[...]

    def sig(v):  # single-EUP sigmoid: one tanh instead of exp + reciprocal
        return 0.5 * jnp.tanh(0.5 * v) + 0.5

    # TODO(synk): holding w_hh resident in the MXU via pltpu.matmul_push_rhs /
    # matmul_acc_lhs / matmul_pop would avoid re-streaming the weight tile each of the
    # 8 steps; skipped pending validation of the explicit-MXU path with f32 operands.
    # ---- recurrence: fully unrolled (T static), 1 fused matmul / step ----
    h = jnp.zeros((B, G), jnp.float32)       # lanes 32:128 are padding and stay exactly 0
    for t in range(T):
        # gather this step's gate rows (batch-major xp); independent of h -> off the chain
        g = jnp.concatenate([xp[b * T + t: b * T + t + 1, :] for b in range(B)], axis=0)
        hp = jnp.dot(h, w_hh, preferred_element_type=jnp.float32)         # (B, 3G)
        r = sig(g[:, 0:G] + hp[:, 0:G])                                   # vreg-aligned slices
        z = sig(g[:, G:2 * G] + hp[:, G:2 * G])
        # PyTorch GRU: r multiplies the full hidden projection including b_hn
        n = jnp.tanh(g[:, 2 * G:3 * G] + r * (hp[:, 2 * G:3 * G] + b_hn))
        h = (1.0 - z) * n + z * h                                         # == h_n[0] (padded)

    # ---- classifier head (lane-dense, 128-wide padded) ----
    p = jnp.dot(h, w1_ref[...], preferred_element_type=jnp.float32) + b1_ref[...]
    p = jnp.maximum(p, 0.0)
    p = jnp.dot(p, w1b_ref[...], preferred_element_type=jnp.float32) + b1b_ref[...]
    p = jnp.maximum(p, 0.0)
    p = jnp.dot(p, w2_ref[...], preferred_element_type=jnp.float32) + b2_ref[...]
    out_ref[...] = jax.nn.sigmoid(p)                                      # (B, 128)


def prepare_kernel_params(params):
    """One-time prep: per-gate 128-lane padding, fused gate weights, pre-summed r/z
    biases, 128-wide head padding.  All padding is with exact zeros."""
    w_ih = params["w_ih"]   # (3, I, H)
    w_hh = params["w_hh"]   # (3, H, H)
    b_ih = params["b_ih"]   # (3, 1, H)
    b_hh = params["b_hh"]   # (3, 1, H)
    G = GATE_PAD

    def pad_cols(a, n):
        return jnp.pad(a, ((0, 0), (0, n - a.shape[1])))

    def pad_rows(a, n):
        return jnp.pad(a, ((0, n - a.shape[0]), (0, 0)))

    # Each gate gets its own 128-lane tile; gate order [r | z | n].
    w_ih_cat = jnp.concatenate([pad_cols(w_ih[g], G) for g in range(3)], axis=1)   # (I, 3G)
    w_hh_cat = pad_rows(
        jnp.concatenate([pad_cols(w_hh[g], G) for g in range(3)], axis=1), G)      # (G, 3G)
    # r/z biases pre-summed; n-gate keeps only b_in here (b_hn stays inside r*(.)).
    b_x = jnp.concatenate([pad_cols(b_ih[0] + b_hh[0], G),
                           pad_cols(b_ih[1] + b_hh[1], G),
                           pad_cols(b_ih[2], G)], axis=1)                           # (1, 3G)
    b_hn = pad_cols(b_hh[2], G)                                                     # (1, G)

    w1 = pad_rows(pad_cols(params["w1"], HEAD_PAD), G)                              # (128, 128)
    b1 = pad_cols(params["b1"], HEAD_PAD)                                           # (1, 128)
    w1b = pad_rows(pad_cols(params["w1b"], HEAD_PAD), HEAD_PAD)                     # (128, 128)
    b1b = pad_cols(params["b1b"], HEAD_PAD)                                         # (1, 128)
    w2 = pad_rows(pad_cols(params["w2"], HEAD_PAD), HEAD_PAD)                       # (128, 128)
    b2 = pad_cols(params["b2"], HEAD_PAD)                                           # (1, 128)

    return dict(w_ih_cat=w_ih_cat, w_hh_cat=w_hh_cat, b_x=b_x, b_hn=b_hn,
                w1=w1, b1=b1, w1b=w1b, b1b=b1b, w2=w2, b2=b2)


@jax.jit
def gru_mod_forward(x, kparams):
    """x: (B, T, I) float32 (batch-first).  Returns (B,) float32 == pred[0, :, 0]."""
    B = x.shape[0]
    x = x.astype(jnp.float32)

    args = (x,
            kparams["w_ih_cat"], kparams["w_hh_cat"],
            kparams["b_x"], kparams["b_hn"],
            kparams["w1"], kparams["b1"],
            kparams["w1b"], kparams["b1b"],
            kparams["w2"], kparams["b2"])

    vmem_spec = pl.BlockSpec(memory_space=pltpu.MemorySpace.VMEM)
    out = pl.pallas_call(
        gru_mod_kernel,
        out_shape=jax.ShapeDtypeStruct((B, HEAD_PAD), jnp.float32),
        in_specs=[vmem_spec] * len(args),
        out_specs=vmem_spec,
    )(*args)
    # TODO(synk): if B is ever scaled up, add a parallel batch grid axis
    # (grid=(B//tb,), dimension_semantics=("parallel",)) so v7x's 2nd TensorCore is
    # used; at B=2 a gridless single program is the right call.
    return out[:, 0]


def init_params(key, input_dim, latents):
    """Deterministic init mimicking PyTorch uniform(-1/sqrt(fan), 1/sqrt(fan))."""
    keys = jax.random.split(key, 10)
    H = latents
    kg = 1.0 / np.sqrt(H)

    def u(k, shape, bound):
        return jax.random.uniform(k, shape, jnp.float32, -bound, bound)

    # GRU weights, pre-transposed to (in, out), stacked on gate axis [r, z, n]
    w_ih = u(keys[0], (3, input_dim, H), kg)
    w_hh = u(keys[1], (3, H, H), kg)
    b_ih = u(keys[2], (3, 1, H), kg)
    b_hh = u(keys[3], (3, 1, H), kg)

    k1 = 1.0 / np.sqrt(H)
    w1 = u(keys[4], (H, 100), k1)
    b1 = u(keys[5], (1, 100), k1)
    k2 = 1.0 / np.sqrt(100)
    w1b = u(keys[6], (100, 100), k2)
    b1b = u(keys[7], (1, 100), k2)
    w2 = u(keys[8], (100, 1), k2)
    b2 = u(keys[9], (1, 1), k2)

    return dict(w_ih=w_ih, w_hh=w_hh, b_ih=b_ih, b_hh=b_hh,
                w1=w1, b1=b1, w1b=w1b, b1b=b1b, w2=w2, b2=b2)


def reference_forward(x, params):
    """Pure-JAX reference (same math as torch.nn.GRU + Linear head), unfused/unpadded."""
    x = x.astype(jnp.float32)
    B, T, I = x.shape
    H = params["w_hh"].shape[1]
    h = jnp.zeros((B, H), jnp.float32)
    for t in range(T):
        xt = x[:, t, :]
        gr = xt @ params["w_ih"][0] + params["b_ih"][0] + h @ params["w_hh"][0] + params["b_hh"][0]
        gz = xt @ params["w_ih"][1] + params["b_ih"][1] + h @ params["w_hh"][1] + params["b_hh"][1]
        r = jax.nn.sigmoid(gr)
        z = jax.nn.sigmoid(gz)
        n = jnp.tanh(xt @ params["w_ih"][2] + params["b_ih"][2]
                     + r * (h @ params["w_hh"][2] + params["b_hh"][2]))
        h = (1.0 - z) * n + z * h
    p = jnp.maximum(h @ params["w1"] + params["b1"], 0.0)
    p = jnp.maximum(p @ params["w1b"] + params["b1b"], 0.0)
    p = jax.nn.sigmoid(p @ params["w2"] + params["b2"])
    return p[:, 0]


if __name__ == "__main__":
    B, T, INPUT_DIM, LATENTS = 2, 8, 4, 32

    key = jax.random.PRNGKey(0)
    kx, kp = jax.random.split(key)
    x = jax.random.normal(kx, (B, T, INPUT_DIM), jnp.float32)
    params = init_params(kp, INPUT_DIM, LATENTS)
    kparams = prepare_kernel_params(params)   # one-time fuse/pad, not per call

    out = gru_mod_forward(x, kparams)
    out = jax.block_until_ready(out)

    ref = jax.block_until_ready(reference_forward(x, params))
    np.testing.assert_allclose(np.asarray(out), np.asarray(ref), rtol=1e-5, atol=1e-5)

    print("KERNEL_OK")
</pallas_src>

<mosaic_0001>
module attributes {stable_mosaic.version = 11 : i64} {
  func.func @gru_mod_kernel(%arg0: memref<2x8x4xf32, #tpu.memory_space<vmem>>, %arg1: memref<4x384xf32, #tpu.memory_space<vmem>>, %arg2: memref<128x384xf32, #tpu.memory_space<vmem>>, %arg3: memref<1x384xf32, #tpu.memory_space<vmem>>, %arg4: memref<1x128xf32, #tpu.memory_space<vmem>>, %arg5: memref<128x128xf32, #tpu.memory_space<vmem>>, %arg6: memref<1x128xf32, #tpu.memory_space<vmem>>, %arg7: memref<128x128xf32, #tpu.memory_space<vmem>>, %arg8: memref<1x128xf32, #tpu.memory_space<vmem>>, %arg9: memref<128x128xf32, #tpu.memory_space<vmem>>, %arg10: memref<1x128xf32, #tpu.memory_space<vmem>>, %arg11: memref<2x128xf32, #tpu.memory_space<vmem>>) attributes {dimension_semantics = [], scalar_prefetch = 0 : i64, scratch_operands = 0 : i64, tpu.core_type = #tpu.core_type<tc>} {
    %c0 = arith.constant 0 : index
    %c0_0 = arith.constant 0 : index
    %c0_1 = arith.constant 0 : index
    %0 = vector.load %arg0[%c0, %c0_0, %c0_1] : memref<2x8x4xf32, #tpu.memory_space<vmem>>, vector<2x8x4xf32>
    %1 = vector.shape_cast %0 : vector<2x8x4xf32> to vector<16x4xf32>
    %c0_2 = arith.constant 0 : index
    %c0_3 = arith.constant 0 : index
    %2 = vector.load %arg1[%c0_2, %c0_3] : memref<4x384xf32, #tpu.memory_space<vmem>>, vector<4x384xf32>
    %cst = arith.constant dense<0.000000e+00> : vector<16x384xf32>
    %3 = tpu.matmul %1, %2, %cst {dimension_numbers = #tpu.dot_dimension_numbers<[1], [0], [0], [1], [0, 0, 1, 1], [], []>} : vector<16x4xf32>, vector<4x384xf32>, vector<16x384xf32> -> vector<16x384xf32>
    %c0_4 = arith.constant 0 : index
    %c0_5 = arith.constant 0 : index
    %4 = vector.load %arg3[%c0_4, %c0_5] : memref<1x384xf32, #tpu.memory_space<vmem>>, vector<1x384xf32>
    %5 = vector.broadcast %4 : vector<1x384xf32> to vector<16x384xf32>
    %6 = arith.addf %3, %5 : vector<16x384xf32>
    %c0_6 = arith.constant 0 : index
    %c0_7 = arith.constant 0 : index
    %7 = vector.load %arg2[%c0_6, %c0_7] : memref<128x384xf32, #tpu.memory_space<vmem>>, vector<128x384xf32>
    %c0_8 = arith.constant 0 : index
    %c0_9 = arith.constant 0 : index
    %8 = vector.load %arg4[%c0_8, %c0_9] : memref<1x128xf32, #tpu.memory_space<vmem>>, vector<1x128xf32>
    %cst_10 = arith.constant 0.000000e+00 : f32
    %9 = vector.broadcast %cst_10 : f32 to vector<2x128xf32>
    %10 = vector.extract_strided_slice %6 {offsets = [0, 0], sizes = [1, 384], strides = [1, 1]} : vector<16x384xf32> to vector<1x384xf32>
    %11 = vector.extract_strided_slice %6 {offsets = [8, 0], sizes = [1, 384], strides = [1, 1]} : vector<16x384xf32> to vector<1x384xf32>
    %12 = tpu.concatenate %10, %11 in 0 : vector<1x384xf32>, vector<1x384xf32> -> vector<2x384xf32>
    %cst_11 = arith.constant dense<0.000000e+00> : vector<2x384xf32>
    %13 = tpu.matmul %9, %7, %cst_11 {dimension_numbers = #tpu.dot_dimension_numbers<[1], [0], [0], [1], [0, 0, 1, 1], [], []>} : vector<2x128xf32>, vector<128x384xf32>, vector<2x384xf32> -> vector<2x384xf32>
    %14 = vector.extract_strided_slice %12 {offsets = [0, 0], sizes = [2, 128], strides = [1, 1]} : vector<2x384xf32> to vector<2x128xf32>
    %15 = vector.extract_strided_slice %13 {offsets = [0, 0], sizes = [2, 128], strides = [1, 1]} : vector<2x384xf32> to vector<2x128xf32>
    %16 = arith.addf %14, %15 : vector<2x128xf32>
    %cst_12 = arith.constant 5.000000e-01 : f32
    %17 = vector.broadcast %cst_12 : f32 to vector<2x128xf32>
    %18 = arith.mulf %17, %16 : vector<2x128xf32>
    %19 = math.tanh %18 : vector<2x128xf32>
    %cst_13 = arith.constant 5.000000e-01 : f32
    %20 = vector.broadcast %cst_13 : f32 to vector<2x128xf32>
    %21 = arith.mulf %20, %19 : vector<2x128xf32>
    %cst_14 = arith.constant 5.000000e-01 : f32
    %22 = vector.broadcast %cst_14 : f32 to vector<2x128xf32>
    %23 = arith.addf %21, %22 : vector<2x128xf32>
    %24 = vector.extract_strided_slice %12 {offsets = [0, 128], sizes = [2, 128], strides = [1, 1]} : vector<2x384xf32> to vector<2x128xf32>
    %25 = vector.extract_strided_slice %13 {offsets = [0, 128], sizes = [2, 128], strides = [1, 1]} : vector<2x384xf32> to vector<2x128xf32>
    %26 = arith.addf %24, %25 : vector<2x128xf32>
    %cst_15 = arith.constant 5.000000e-01 : f32
    %27 = vector.broadcast %cst_15 : f32 to vector<2x128xf32>
    %28 = arith.mulf %27, %26 : vector<2x128xf32>
    %29 = math.tanh %28 : vector<2x128xf32>
    %cst_16 = arith.constant 5.000000e-01 : f32
    %30 = vector.broadcast %cst_16 : f32 to vector<2x128xf32>
    %31 = arith.mulf %30, %29 : vector<2x128xf32>
    %cst_17 = arith.constant 5.000000e-01 : f32
    %32 = vector.broadcast %cst_17 : f32 to vector<2x128xf32>
    %33 = arith.addf %31, %32 : vector<2x128xf32>
    %34 = vector.extract_strided_slice %12 {offsets = [0, 256], sizes = [2, 128], strides = [1, 1]} : vector<2x384xf32> to vector<2x128xf32>
    %35 = vector.extract_strided_slice %13 {offsets = [0, 256], sizes = [2, 128], strides = [1, 1]} : vector<2x384xf32> to vector<2x128xf32>
    %36 = vector.broadcast %8 : vector<1x128xf32> to vector<2x128xf32>
    %37 = arith.addf %35, %36 : vector<2x128xf32>
    %38 = arith.mulf %23, %37 : vector<2x128xf32>
    %39 = arith.addf %34, %38 : vector<2x128xf32>
    %40 = math.tanh %39 : vector<2x128xf32>
    %cst_18 = arith.constant 1.000000e+00 : f32
    %41 = vector.broadcast %cst_18 : f32 to vector<2x128xf32>
    %42 = arith.subf %41, %33 : vector<2x128xf32>
    %43 = arith.mulf %42, %40 : vector<2x128xf32>
    %44 = arith.mulf %33, %9 : vector<2x128xf32>
    %45 = arith.addf %43, %44 : vector<2x128xf32>
    %46 = vector.extract_strided_slice %6 {offsets = [1, 0], sizes = [1, 384], strides = [1, 1]} : vector<16x384xf32> to vector<1x384xf32>
    %47 = vector.extract_strided_slice %6 {offsets = [9, 0], sizes = [1, 384], strides = [1, 1]} : vector<16x384xf32> to vector<1x384xf32>
    %48 = tpu.concatenate %46, %47 in 0 : vector<1x384xf32>, vector<1x384xf32> -> vector<2x384xf32>
    %cst_19 = arith.constant dense<0.000000e+00> : vector<2x384xf32>
    %49 = tpu.matmul %45, %7, %cst_19 {dimension_numbers = #tpu.dot_dimension_numbers<[1], [0], [0], [1], [0, 0, 1, 1], [], []>} : vector<2x128xf32>, vector<128x384xf32>, vector<2x384xf32> -> vector<2x384xf32>
    %50 = vector.extract_strided_slice %48 {offsets = [0, 0], sizes = [2, 128], strides = [1, 1]} : vector<2x384xf32> to vector<2x128xf32>
    %51 = vector.extract_strided_slice %49 {offsets = [0, 0], sizes = [2, 128], strides = [1, 1]} : vector<2x384xf32> to vector<2x128xf32>
    %52 = arith.addf %50, %51 : vector<2x128xf32>
    %cst_20 = arith.constant 5.000000e-01 : f32
    %53 = vector.broadcast %cst_20 : f32 to vector<2x128xf32>
    %54 = arith.mulf %53, %52 : vector<2x128xf32>
    %55 = math.tanh %54 : vector<2x128xf32>
    %cst_21 = arith.constant 5.000000e-01 : f32
    %56 = vector.broadcast %cst_21 : f32 to vector<2x128xf32>
    %57 = arith.mulf %56, %55 : vector<2x128xf32>
    %cst_22 = arith.constant 5.000000e-01 : f32
    %58 = vector.broadcast %cst_22 : f32 to vector<2x128xf32>
    %59 = arith.addf %57, %58 : vector<2x128xf32>
    %60 = vector.extract_strided_slice %48 {offsets = [0, 128], sizes = [2, 128], strides = [1, 1]} : vector<2x384xf32> to vector<2x128xf32>
    %61 = vector.extract_strided_slice %49 {offsets = [0, 128], sizes = [2, 128], strides = [1, 1]} : vector<2x384xf32> to vector<2x128xf32>
    %62 = arith.addf %60, %61 : vector<2x128xf32>
    %cst_23 = arith.constant 5.000000e-01 : f32
    %63 = vector.broadcast %cst_23 : f32 to vector<2x128xf32>
    %64 = arith.mulf %63, %62 : vector<2x128xf32>
    %65 = math.tanh %64 : vector<2x128xf32>
    %cst_24 = arith.constant 5.000000e-01 : f32
    %66 = vector.broadcast %cst_24 : f32 to vector<2x128xf32>
    %67 = arith.mulf %66, %65 : vector<2x128xf32>
    %cst_25 = arith.constant 5.000000e-01 : f32
    %68 = vector.broadcast %cst_25 : f32 to vector<2x128xf32>
    %69 = arith.addf %67, %68 : vector<2x128xf32>
    %70 = vector.extract_strided_slice %48 {offsets = [0, 256], sizes = [2, 128], strides = [1, 1]} : vector<2x384xf32> to vector<2x128xf32>
    %71 = vector.extract_strided_slice %49 {offsets = [0, 256], sizes = [2, 128], strides = [1, 1]} : vector<2x384xf32> to vector<2x128xf32>
    %72 = vector.broadcast %8 : vector<1x128xf32> to vector<2x128xf32>
    %73 = arith.addf %71, %72 : vector<2x128xf32>
    %74 = arith.mulf %59, %73 : vector<2x128xf32>
    %75 = arith.addf %70, %74 : vector<2x128xf32>
    %76 = math.tanh %75 : vector<2x128xf32>
    %cst_26 = arith.constant 1.000000e+00 : f32
    %77 = vector.broadcast %cst_26 : f32 to vector<2x128xf32>
    %78 = arith.subf %77, %69 : vector<2x128xf32>
    %79 = arith.mulf %78, %76 : vector<2x128xf32>
    %80 = arith.mulf %69, %45 : vector<2x128xf32>
    %81 = arith.addf %79, %80 : vector<2x128xf32>
    %82 = vector.extract_strided_slice %6 {offsets = [2, 0], sizes = [1, 384], strides = [1, 1]} : vector<16x384xf32> to vector<1x384xf32>
    %83 = vector.extract_strided_slice %6 {offsets = [10, 0], sizes = [1, 384], strides = [1, 1]} : vector<16x384xf32> to vector<1x384xf32>
    %84 = tpu.concatenate %82, %83 in 0 : vector<1x384xf32>, vector<1x384xf32> -> vector<2x384xf32>
    %cst_27 = arith.constant dense<0.000000e+00> : vector<2x384xf32>
    %85 = tpu.matmul %81, %7, %cst_27 {dimension_numbers = #tpu.dot_dimension_numbers<[1], [0], [0], [1], [0, 0, 1, 1], [], []>} : vector<2x128xf32>, vector<128x384xf32>, vector<2x384xf32> -> vector<2x384xf32>
    %86 = vector.extract_strided_slice %84 {offsets = [0, 0], sizes = [2, 128], strides = [1, 1]} : vector<2x384xf32> to vector<2x128xf32>
    %87 = vector.extract_strided_slice %85 {offsets = [0, 0], sizes = [2, 128], strides = [1, 1]} : vector<2x384xf32> to vector<2x128xf32>
    %88 = arith.addf %86, %87 : vector<2x128xf32>
    %cst_28 = arith.constant 5.000000e-01 : f32
    %89 = vector.broadcast %cst_28 : f32 to vector<2x128xf32>
    %90 = arith.mulf %89, %88 : vector<2x128xf32>
    %91 = math.tanh %90 : vector<2x128xf32>
    %cst_29 = arith.constant 5.000000e-01 : f32
    %92 = vector.broadcast %cst_29 : f32 to vector<2x128xf32>
    %93 = arith.mulf %92, %91 : vector<2x128xf32>
    %cst_30 = arith.constant 5.000000e-01 : f32
    %94 = vector.broadcast %cst_30 : f32 to vector<2x128xf32>
    %95 = arith.addf %93, %94 : vector<2x128xf32>
    %96 = vector.extract_strided_slice %84 {offsets = [0, 128], sizes = [2, 128], strides = [1, 1]} : vector<2x384xf32> to vector<2x128xf32>
    %97 = vector.extract_strided_slice %85 {offsets = [0, 128], sizes = [2, 128], strides = [1, 1]} : vector<2x384xf32> to vector<2x128xf32>
    %98 = arith.addf %96, %97 : vector<2x128xf32>
    %cst_31 = arith.constant 5.000000e-01 : f32
    %99 = vector.broadcast %cst_31 : f32 to vector<2x128xf32>
    %100 = arith.mulf %99, %98 : vector<2x128xf32>
    %101 = math.tanh %100 : vector<2x128xf32>
    %cst_32 = arith.constant 5.000000e-01 : f32
    %102 = vector.broadcast %cst_32 : f32 to vector<2x128xf32>
    %103 = arith.mulf %102, %101 : vector<2x128xf32>
    %cst_33 = arith.constant 5.000000e-01 : f32
    %104 = vector.broadcast %cst_33 : f32 to vector<2x128xf32>
    %105 = arith.addf %103, %104 : vector<2x128xf32>
    %106 = vector.extract_strided_slice %84 {offsets = [0, 256], sizes = [2, 128], strides = [1, 1]} : vector<2x384xf32> to vector<2x128xf32>
    %107 = vector.extract_strided_slice %85 {offsets = [0, 256], sizes = [2, 128], strides = [1, 1]} : vector<2x384xf32> to vector<2x128xf32>
    %108 = vector.broadcast %8 : vector<1x128xf32> to vector<2x128xf32>
    %109 = arith.addf %107, %108 : vector<2x128xf32>
    %110 = arith.mulf %95, %109 : vector<2x128xf32>
    %111 = arith.addf %106, %110 : vector<2x128xf32>
    %112 = math.tanh %111 : vector<2x128xf32>
    %cst_34 = arith.constant 1.000000e+00 : f32
    %113 = vector.broadcast %cst_34 : f32 to vector<2x128xf32>
    %114 = arith.subf %113, %105 : vector<2x128xf32>
    %115 = arith.mulf %114, %112 : vector<2x128xf32>
    %116 = arith.mulf %105, %81 : vector<2x128xf32>
    %117 = arith.addf %115, %116 : vector<2x128xf32>
    %118 = vector.extract_strided_slice %6 {offsets = [3, 0], sizes = [1, 384], strides = [1, 1]} : vector<16x384xf32> to vector<1x384xf32>
    %119 = vector.extract_strided_slice %6 {offsets = [11, 0], sizes = [1, 384], strides = [1, 1]} : vector<16x384xf32> to vector<1x384xf32>
    %120 = tpu.concatenate %118, %119 in 0 : vector<1x384xf32>, vector<1x384xf32> -> vector<2x384xf32>
    %cst_35 = arith.constant dense<0.000000e+00> : vector<2x384xf32>
    %121 = tpu.matmul %117, %7, %cst_35 {dimension_numbers = #tpu.dot_dimension_numbers<[1], [0], [0], [1], [0, 0, 1, 1], [], []>} : vector<2x128xf32>, vector<128x384xf32>, vector<2x384xf32> -> vector<2x384xf32>
    %122 = vector.extract_strided_slice %120 {offsets = [0, 0], sizes = [2, 128], strides = [1, 1]} : vector<2x384xf32> to vector<2x128xf32>
    %123 = vector.extract_strided_slice %121 {offsets = [0, 0], sizes = [2, 128], strides = [1, 1]} : vector<2x384xf32> to vector<2x128xf32>
    %124 = arith.addf %122, %123 : vector<2x128xf32>
    %cst_36 = arith.constant 5.000000e-01 : f32
    %125 = vector.broadcast %cst_36 : f32 to vector<2x128xf32>
    %126 = arith.mulf %125, %124 : vector<2x128xf32>
    %127 = math.tanh %126 : vector<2x128xf32>
    %cst_37 = arith.constant 5.000000e-01 : f32
    %128 = vector.broadcast %cst_37 : f32 to vector<2x128xf32>
    %129 = arith.mulf %128, %127 : vector<2x128xf32>
    %cst_38 = arith.constant 5.000000e-01 : f32
    %130 = vector.broadcast %cst_38 : f32 to vector<2x128xf32>
    %131 = arith.addf %129, %130 : vector<2x128xf32>
    %132 = vector.extract_strided_slice %120 {offsets = [0, 128], sizes = [2, 128], strides = [1, 1]} : vector<2x384xf32> to vector<2x128xf32>
    %133 = vector.extract_strided_slice %121 {offsets = [0, 128], sizes = [2, 128], strides = [1, 1]} : vector<2x384xf32> to vector<2x128xf32>
    %134 = arith.addf %132, %133 : vector<2x128xf32>
    %cst_39 = arith.constant 5.000000e-01 : f32
    %135 = vector.broadcast %cst_39 : f32 to vector<2x128xf32>
    %136 = arith.mulf %135, %134 : vector<2x128xf32>
    %137 = math.tanh %136 : vector<2x128xf32>
    %cst_40 = arith.constant 5.000000e-01 : f32
    %138 = vector.broadcast %cst_40 : f32 to vector<2x128xf32>
    %139 = arith.mulf %138, %137 : vector<2x128xf32>
    %cst_41 = arith.constant 5.000000e-01 : f32
    %140 = vector.broadcast %cst_41 : f32 to vector<2x128xf32>
    %141 = arith.addf %139, %140 : vector<2x128xf32>
    %142 = vector.extract_strided_slice %120 {offsets = [0, 256], sizes = [2, 128], strides = [1, 1]} : vector<2x384xf32> to vector<2x128xf32>
    %143 = vector.extract_strided_slice %121 {offsets = [0, 256], sizes = [2, 128], strides = [1, 1]} : vector<2x384xf32> to vector<2x128xf32>
    %144 = vector.broadcast %8 : vector<1x128xf32> to vector<2x128xf32>
    %145 = arith.addf %143, %144 : vector<2x128xf32>
    %146 = arith.mulf %131, %145 : vector<2x128xf32>
    %147 = arith.addf %142, %146 : vector<2x128xf32>
    %148 = math.tanh %147 : vector<2x128xf32>
    %cst_42 = arith.constant 1.000000e+00 : f32
    %149 = vector.broadcast %cst_42 : f32 to vector<2x128xf32>
    %150 = arith.subf %149, %141 : vector<2x128xf32>
    %151 = arith.mulf %150, %148 : vector<2x128xf32>
    %152 = arith.mulf %141, %117 : vector<2x128xf32>
    %153 = arith.addf %151, %152 : vector<2x128xf32>
    %154 = vector.extract_strided_slice %6 {offsets = [4, 0], sizes = [1, 384], strides = [1, 1]} : vector<16x384xf32> to vector<1x384xf32>
    %155 = vector.extract_strided_slice %6 {offsets = [12, 0], sizes = [1, 384], strides = [1, 1]} : vector<16x384xf32> to vector<1x384xf32>
    %156 = tpu.concatenate %154, %155 in 0 : vector<1x384xf32>, vector<1x384xf32> -> vector<2x384xf32>
    %cst_43 = arith.constant dense<0.000000e+00> : vector<2x384xf32>
    %157 = tpu.matmul %153, %7, %cst_43 {dimension_numbers = #tpu.dot_dimension_numbers<[1], [0], [0], [1], [0, 0, 1, 1], [], []>} : vector<2x128xf32>, vector<128x384xf32>, vector<2x384xf32> -> vector<2x384xf32>
    %158 = vector.extract_strided_slice %156 {offsets = [0, 0], sizes = [2, 128], strides = [1, 1]} : vector<2x384xf32> to vector<2x128xf32>
    %159 = vector.extract_strided_slice %157 {offsets = [0, 0], sizes = [2, 128], strides = [1, 1]} : vector<2x384xf32> to vector<2x128xf32>
    %160 = arith.addf %158, %159 : vector<2x128xf32>
    %cst_44 = arith.constant 5.000000e-01 : f32
    %161 = vector.broadcast %cst_44 : f32 to vector<2x128xf32>
    %162 = arith.mulf %161, %160 : vector<2x128xf32>
    %163 = math.tanh %162 : vector<2x128xf32>
    %cst_45 = arith.constant 5.000000e-01 : f32
    %164 = vector.broadcast %cst_45 : f32 to vector<2x128xf32>
    %165 = arith.mulf %164, %163 : vector<2x128xf32>
    %cst_46 = arith.constant 5.000000e-01 : f32
    %166 = vector.broadcast %cst_46 : f32 to vector<2x128xf32>
    %167 = arith.addf %165, %166 : vector<2x128xf32>
    %168 = vector.extract_strided_slice %156 {offsets = [0, 128], sizes = [2, 128], strides = [1, 1]} : vector<2x384xf32> to vector<2x128xf32>
    %169 = vector.extract_strided_slice %157 {offsets = [0, 128], sizes = [2, 128], strides = [1, 1]} : vector<2x384xf32> to vector<2x128xf32>
    %170 = arith.addf %168, %169 : vector<2x128xf32>
    %cst_47 = arith.constant 5.000000e-01 : f32
    %171 = vector.broadcast %cst_47 : f32 to vector<2x128xf32>
    %172 = arith.mulf %171, %170 : vector<2x128xf32>
    %173 = math.tanh %172 : vector<2x128xf32>
    %cst_48 = arith.constant 5.000000e-01 : f32
    %174 = vector.broadcast %cst_48 : f32 to vector<2x128xf32>
    %175 = arith.mulf %174, %173 : vector<2x128xf32>
    %cst_49 = arith.constant 5.000000e-01 : f32
    %176 = vector.broadcast %cst_49 : f32 to vector<2x128xf32>
    %177 = arith.addf %175, %176 : vector<2x128xf32>
    %178 = vector.extract_strided_slice %156 {offsets = [0, 256], sizes = [2, 128], strides = [1, 1]} : vector<2x384xf32> to vector<2x128xf32>
    %179 = vector.extract_strided_slice %157 {offsets = [0, 256], sizes = [2, 128], strides = [1, 1]} : vector<2x384xf32> to vector<2x128xf32>
    %180 = vector.broadcast %8 : vector<1x128xf32> to vector<2x128xf32>
    %181 = arith.addf %179, %180 : vector<2x128xf32>
    %182 = arith.mulf %167, %181 : vector<2x128xf32>
    %183 = arith.addf %178, %182 : vector<2x128xf32>
    %184 = math.tanh %183 : vector<2x128xf32>
    %cst_50 = arith.constant 1.000000e+00 : f32
    %185 = vector.broadcast %cst_50 : f32 to vector<2x128xf32>
    %186 = arith.subf %185, %177 : vector<2x128xf32>
    %187 = arith.mulf %186, %184 : vector<2x128xf32>
    %188 = arith.mulf %177, %153 : vector<2x128xf32>
    %189 = arith.addf %187, %188 : vector<2x128xf32>
    %190 = vector.extract_strided_slice %6 {offsets = [5, 0], sizes = [1, 384], strides = [1, 1]} : vector<16x384xf32> to vector<1x384xf32>
    %191 = vector.extract_strided_slice %6 {offsets = [13, 0], sizes = [1, 384], strides = [1, 1]} : vector<16x384xf32> to vector<1x384xf32>
    %192 = tpu.concatenate %190, %191 in 0 : vector<1x384xf32>, vector<1x384xf32> -> vector<2x384xf32>
    %cst_51 = arith.constant dense<0.000000e+00> : vector<2x384xf32>
    %193 = tpu.matmul %189, %7, %cst_51 {dimension_numbers = #tpu.dot_dimension_numbers<[1], [0], [0], [1], [0, 0, 1, 1], [], []>} : vector<2x128xf32>, vector<128x384xf32>, vector<2x384xf32> -> vector<2x384xf32>
    %194 = vector.extract_strided_slice %192 {offsets = [0, 0], sizes = [2, 128], strides = [1, 1]} : vector<2x384xf32> to vector<2x128xf32>
    %195 = vector.extract_strided_slice %193 {offsets = [0, 0], sizes = [2, 128], strides = [1, 1]} : vector<2x384xf32> to vector<2x128xf32>
    %196 = arith.addf %194, %195 : vector<2x128xf32>
    %cst_52 = arith.constant 5.000000e-01 : f32
    %197 = vector.broadcast %cst_52 : f32 to vector<2x128xf32>
    %198 = arith.mulf %197, %196 : vector<2x128xf32>
    %199 = math.tanh %198 : vector<2x128xf32>
    %cst_53 = arith.constant 5.000000e-01 : f32
    %200 = vector.broadcast %cst_53 : f32 to vector<2x128xf32>
    %201 = arith.mulf %200, %199 : vector<2x128xf32>
    %cst_54 = arith.constant 5.000000e-01 : f32
    %202 = vector.broadcast %cst_54 : f32 to vector<2x128xf32>
    %203 = arith.addf %201, %202 : vector<2x128xf32>
    %204 = vector.extract_strided_slice %192 {offsets = [0, 128], sizes = [2, 128], strides = [1, 1]} : vector<2x384xf32> to vector<2x128xf32>
    %205 = vector.extract_strided_slice %193 {offsets = [0, 128], sizes = [2, 128], strides = [1, 1]} : vector<2x384xf32> to vector<2x128xf32>
    %206 = arith.addf %204, %205 : vector<2x128xf32>
    %cst_55 = arith.constant 5.000000e-01 : f32
    %207 = vector.broadcast %cst_55 : f32 to vector<2x128xf32>
    %208 = arith.mulf %207, %206 : vector<2x128xf32>
    %209 = math.tanh %208 : vector<2x128xf32>
    %cst_56 = arith.constant 5.000000e-01 : f32
    %210 = vector.broadcast %cst_56 : f32 to vector<2x128xf32>
    %211 = arith.mulf %210, %209 : vector<2x128xf32>
    %cst_57 = arith.constant 5.000000e-01 : f32
    %212 = vector.broadcast %cst_57 : f32 to vector<2x128xf32>
    %213 = arith.addf %211, %212 : vector<2x128xf32>
    %214 = vector.extract_strided_slice %192 {offsets = [0, 256], sizes = [2, 128], strides = [1, 1]} : vector<2x384xf32> to vector<2x128xf32>
    %215 = vector.extract_strided_slice %193 {offsets = [0, 256], sizes = [2, 128], strides = [1, 1]} : vector<2x384xf32> to vector<2x128xf32>
    %216 = vector.broadcast %8 : vector<1x128xf32> to vector<2x128xf32>
    %217 = arith.addf %215, %216 : vector<2x128xf32>
    %218 = arith.mulf %203, %217 : vector<2x128xf32>
    %219 = arith.addf %214, %218 : vector<2x128xf32>
    %220 = math.tanh %219 : vector<2x128xf32>
    %cst_58 = arith.constant 1.000000e+00 : f32
    %221 = vector.broadcast %cst_58 : f32 to vector<2x128xf32>
    %222 = arith.subf %221, %213 : vector<2x128xf32>
    %223 = arith.mulf %222, %220 : vector<2x128xf32>
    %224 = arith.mulf %213, %189 : vector<2x128xf32>
    %225 = arith.addf %223, %224 : vector<2x128xf32>
    %226 = vector.extract_strided_slice %6 {offsets = [6, 0], sizes = [1, 384], strides = [1, 1]} : vector<16x384xf32> to vector<1x384xf32>
    %227 = vector.extract_strided_slice %6 {offsets = [14, 0], sizes = [1, 384], strides = [1, 1]} : vector<16x384xf32> to vector<1x384xf32>
    %228 = tpu.concatenate %226, %227 in 0 : vector<1x384xf32>, vector<1x384xf32> -> vector<2x384xf32>
    %cst_59 = arith.constant dense<0.000000e+00> : vector<2x384xf32>
    %229 = tpu.matmul %225, %7, %cst_59 {dimension_numbers = #tpu.dot_dimension_numbers<[1], [0], [0], [1], [0, 0, 1, 1], [], []>} : vector<2x128xf32>, vector<128x384xf32>, vector<2x384xf32> -> vector<2x384xf32>
    %230 = vector.extract_strided_slice %228 {offsets = [0, 0], sizes = [2, 128], strides = [1, 1]} : vector<2x384xf32> to vector<2x128xf32>
    %231 = vector.extract_strided_slice %229 {offsets = [0, 0], sizes = [2, 128], strides = [1, 1]} : vector<2x384xf32> to vector<2x128xf32>
    %232 = arith.addf %230, %231 : vector<2x128xf32>
    %cst_60 = arith.constant 5.000000e-01 : f32
    %233 = vector.broadcast %cst_60 : f32 to vector<2x128xf32>
    %234 = arith.mulf %233, %232 : vector<2x128xf32>
    %235 = math.tanh %234 : vector<2x128xf32>
    %cst_61 = arith.constant 5.000000e-01 : f32
    %236 = vector.broadcast %cst_61 : f32 to vector<2x128xf32>
    %237 = arith.mulf %236, %235 : vector<2x128xf32>
    %cst_62 = arith.constant 5.000000e-01 : f32
    %238 = vector.broadcast %cst_62 : f32 to vector<2x128xf32>
    %239 = arith.addf %237, %238 : vector<2x128xf32>
    %240 = vector.extract_strided_slice %228 {offsets = [0, 128], sizes = [2, 128], strides = [1, 1]} : vector<2x384xf32> to vector<2x128xf32>
    %241 = vector.extract_strided_slice %229 {offsets = [0, 128], sizes = [2, 128], strides = [1, 1]} : vector<2x384xf32> to vector<2x128xf32>
    %242 = arith.addf %240, %241 : vector<2x128xf32>
    %cst_63 = arith.constant 5.000000e-01 : f32
    %243 = vector.broadcast %cst_63 : f32 to vector<2x128xf32>
    %244 = arith.mulf %243, %242 : vector<2x128xf32>
    %245 = math.tanh %244 : vector<2x128xf32>
    %cst_64 = arith.constant 5.000000e-01 : f32
    %246 = vector.broadcast %cst_64 : f32 to vector<2x128xf32>
    %247 = arith.mulf %246, %245 : vector<2x128xf32>
    %cst_65 = arith.constant 5.000000e-01 : f32
    %248 = vector.broadcast %cst_65 : f32 to vector<2x128xf32>
    %249 = arith.addf %247, %248 : vector<2x128xf32>
    %250 = vector.extract_strided_slice %228 {offsets = [0, 256], sizes = [2, 128], strides = [1, 1]} : vector<2x384xf32> to vector<2x128xf32>
    %251 = vector.extract_strided_slice %229 {offsets = [0, 256], sizes = [2, 128], strides = [1, 1]} : vector<2x384xf32> to vector<2x128xf32>
    %252 = vector.broadcast %8 : vector<1x128xf32> to vector<2x128xf32>
    %253 = arith.addf %251, %252 : vector<2x128xf32>
    %254 = arith.mulf %239, %253 : vector<2x128xf32>
    %255 = arith.addf %250, %254 : vector<2x128xf32>
    %256 = math.tanh %255 : vector<2x128xf32>
    %cst_66 = arith.constant 1.000000e+00 : f32
    %257 = vector.broadcast %cst_66 : f32 to vector<2x128xf32>
    %258 = arith.subf %257, %249 : vector<2x128xf32>
    %259 = arith.mulf %258, %256 : vector<2x128xf32>
    %260 = arith.mulf %249, %225 : vector<2x128xf32>
    %261 = arith.addf %259, %260 : vector<2x128xf32>
    %262 = vector.extract_strided_slice %6 {offsets = [7, 0], sizes = [1, 384], strides = [1, 1]} : vector<16x384xf32> to vector<1x384xf32>
    %263 = vector.extract_strided_slice %6 {offsets = [15, 0], sizes = [1, 384], strides = [1, 1]} : vector<16x384xf32> to vector<1x384xf32>
    %264 = tpu.concatenate %262, %263 in 0 : vector<1x384xf32>, vector<1x384xf32> -> vector<2x384xf32>
    %cst_67 = arith.constant dense<0.000000e+00> : vector<2x384xf32>
    %265 = tpu.matmul %261, %7, %cst_67 {dimension_numbers = #tpu.dot_dimension_numbers<[1], [0], [0], [1], [0, 0, 1, 1], [], []>} : vector<2x128xf32>, vector<128x384xf32>, vector<2x384xf32> -> vector<2x384xf32>
    %266 = vector.extract_strided_slice %264 {offsets = [0, 0], sizes = [2, 128], strides = [1, 1]} : vector<2x384xf32> to vector<2x128xf32>
    %267 = vector.extract_strided_slice %265 {offsets = [0, 0], sizes = [2, 128], strides = [1, 1]} : vector<2x384xf32> to vector<2x128xf32>
    %268 = arith.addf %266, %267 : vector<2x128xf32>
    %cst_68 = arith.constant 5.000000e-01 : f32
    %269 = vector.broadcast %cst_68 : f32 to vector<2x128xf32>
    %270 = arith.mulf %269, %268 : vector<2x128xf32>
    %271 = math.tanh %270 : vector<2x128xf32>
    %cst_69 = arith.constant 5.000000e-01 : f32
    %272 = vector.broadcast %cst_69 : f32 to vector<2x128xf32>
    %273 = arith.mulf %272, %271 : vector<2x128xf32>
    %cst_70 = arith.constant 5.000000e-01 : f32
    %274 = vector.broadcast %cst_70 : f32 to vector<2x128xf32>
    %275 = arith.addf %273, %274 : vector<2x128xf32>
    %276 = vector.extract_strided_slice %264 {offsets = [0, 128], sizes = [2, 128], strides = [1, 1]} : vector<2x384xf32> to vector<2x128xf32>
    %277 = vector.extract_strided_slice %265 {offsets = [0, 128], sizes = [2, 128], strides = [1, 1]} : vector<2x384xf32> to vector<2x128xf32>
    %278 = arith.addf %276, %277 : vector<2x128xf32>
    %cst_71 = arith.constant 5.000000e-01 : f32
    %279 = vector.broadcast %cst_71 : f32 to vector<2x128xf32>
    %280 = arith.mulf %279, %278 : vector<2x128xf32>
    %281 = math.tanh %280 : vector<2x128xf32>
    %cst_72 = arith.constant 5.000000e-01 : f32
    %282 = vector.broadcast %cst_72 : f32 to vector<2x128xf32>
    %283 = arith.mulf %282, %281 : vector<2x128xf32>
    %cst_73 = arith.constant 5.000000e-01 : f32
    %284 = vector.broadcast %cst_73 : f32 to vector<2x128xf32>
    %285 = arith.addf %283, %284 : vector<2x128xf32>
    %286 = vector.extract_strided_slice %264 {offsets = [0, 256], sizes = [2, 128], strides = [1, 1]} : vector<2x384xf32> to vector<2x128xf32>
    %287 = vector.extract_strided_slice %265 {offsets = [0, 256], sizes = [2, 128], strides = [1, 1]} : vector<2x384xf32> to vector<2x128xf32>
    %288 = vector.broadcast %8 : vector<1x128xf32> to vector<2x128xf32>
    %289 = arith.addf %287, %288 : vector<2x128xf32>
    %290 = arith.mulf %275, %289 : vector<2x128xf32>
    %291 = arith.addf %286, %290 : vector<2x128xf32>
    %292 = math.tanh %291 : vector<2x128xf32>
    %cst_74 = arith.constant 1.000000e+00 : f32
    %293 = vector.broadcast %cst_74 : f32 to vector<2x128xf32>
    %294 = arith.subf %293, %285 : vector<2x128xf32>
    %295 = arith.mulf %294, %292 : vector<2x128xf32>
    %296 = arith.mulf %285, %261 : vector<2x128xf32>
    %297 = arith.addf %295, %296 : vector<2x128xf32>
    %c0_75 = arith.constant 0 : index
    %c0_76 = arith.constant 0 : index
    %298 = vector.load %arg5[%c0_75, %c0_76] : memref<128x128xf32, #tpu.memory_space<vmem>>, vector<128x128xf32>
    %cst_77 = arith.constant dense<0.000000e+00> : vector<2x128xf32>
    %299 = tpu.matmul %297, %298, %cst_77 {dimension_numbers = #tpu.dot_dimension_numbers<[1], [0], [0], [1], [0, 0, 1, 1], [], []>} : vector<2x128xf32>, vector<128x128xf32>, vector<2x128xf32> -> vector<2x128xf32>
    %c0_78 = arith.constant 0 : index
    %c0_79 = arith.constant 0 : index
    %300 = vector.load %arg6[%c0_78, %c0_79] : memref<1x128xf32, #tpu.memory_space<vmem>>, vector<1x128xf32>
    %301 = vector.broadcast %300 : vector<1x128xf32> to vector<2x128xf32>
    %302 = arith.addf %299, %301 : vector<2x128xf32>
    %cst_80 = arith.constant 0.000000e+00 : f32
    %303 = vector.broadcast %cst_80 : f32 to vector<2x128xf32>
    %304 = arith.maximumf %302, %303 : vector<2x128xf32>
    %c0_81 = arith.constant 0 : index
    %c0_82 = arith.constant 0 : index
    %305 = vector.load %arg7[%c0_81, %c0_82] : memref<128x128xf32, #tpu.memory_space<vmem>>, vector<128x128xf32>
    %cst_83 = arith.constant dense<0.000000e+00> : vector<2x128xf32>
    %306 = tpu.matmul %304, %305, %cst_83 {dimension_numbers = #tpu.dot_dimension_numbers<[1], [0], [0], [1], [0, 0, 1, 1], [], []>} : vector<2x128xf32>, vector<128x128xf32>, vector<2x128xf32> -> vector<2x128xf32>
    %c0_84 = arith.constant 0 : index
    %c0_85 = arith.constant 0 : index
    %307 = vector.load %arg8[%c0_84, %c0_85] : memref<1x128xf32, #tpu.memory_space<vmem>>, vector<1x128xf32>
    %308 = vector.broadcast %307 : vector<1x128xf32> to vector<2x128xf32>
    %309 = arith.addf %306, %308 : vector<2x128xf32>
    %cst_86 = arith.constant 0.000000e+00 : f32
    %310 = vector.broadcast %cst_86 : f32 to vector<2x128xf32>
    %311 = arith.maximumf %309, %310 : vector<2x128xf32>
    %c0_87 = arith.constant 0 : index
    %c0_88 = arith.constant 0 : index
    %312 = vector.load %arg9[%c0_87, %c0_88] : memref<128x128xf32, #tpu.memory_space<vmem>>, vector<128x128xf32>
    %cst_89 = arith.constant dense<0.000000e+00> : vector<2x128xf32>
    %313 = tpu.matmul %311, %312, %cst_89 {dimension_numbers = #tpu.dot_dimension_numbers<[1], [0], [0], [1], [0, 0, 1, 1], [], []>} : vector<2x128xf32>, vector<128x128xf32>, vector<2x128xf32> -> vector<2x128xf32>
    %c0_90 = arith.constant 0 : index
    %c0_91 = arith.constant 0 : index
    %314 = vector.load %arg10[%c0_90, %c0_91] : memref<1x128xf32, #tpu.memory_space<vmem>>, vector<1x128xf32>
    %315 = vector.broadcast %314 : vector<1x128xf32> to vector<2x128xf32>
    %316 = arith.addf %313, %315 : vector<2x128xf32>
    %317 = arith.negf %316 : vector<2x128xf32>
    %318 = math.exp %317 : vector<2x128xf32>
    %cst_92 = arith.constant 1.000000e+00 : f32
    %319 = vector.broadcast %cst_92 : f32 to vector<2x128xf32>
    %320 = arith.addf %319, %318 : vector<2x128xf32>
    %321 = arith.divf %319, %320 : vector<2x128xf32>
    %c0_93 = arith.constant 0 : index
    %c0_94 = arith.constant 0 : index
    %322 = vector.load %arg11[%c0_93, %c0_94] : memref<2x128xf32, #tpu.memory_space<vmem>>, vector<2x128xf32>
    tpu.vector_store %arg11[%c0_93, %c0_94], %321 {strides = array<i32>} : memref<2x128xf32, #tpu.memory_space<vmem>>, vector<2x128xf32>,
    return
  }
}

</mosaic_0001>

<llo_original>
// kernel: gru_mod_forward.1
$region0: #{gru_mod_forward.1}
  #allocation0 [shape = 'u32[]', space=smem, size = 0x4, offset = 0x4, fixed_abs, tag = 'smem constant byte address 0x4 - core index']
  #allocation1 [shape = 'u32[144,128]{1,0:T(1,128)}', space=vmem, size = 0x12000, scoped, tag = 'internal scratch']
  %s0 = inlined_call_operand.vmem [shape: f32[2,8,4], index: 0, kind: input, shape index: {}]
  %s1 = inlined_call_operand.vmem [shape: f32[4,384], index: 1, kind: input, shape index: {}]
  %s2 = inlined_call_operand.hbm [shape: f32[128,384], index: 2, kind: input, shape index: {}]
  %s3 = inlined_call_operand.vmem [shape: f32[1,384], index: 3, kind: input, shape index: {}]
  %s4 = inlined_call_operand.vmem [shape: f32[1,128], index: 4, kind: input, shape index: {}]
  %s5 = inlined_call_operand.hbm [shape: f32[128,128], index: 5, kind: input, shape index: {}]
  %s6 = inlined_call_operand.vmem [shape: f32[1,128], index: 6, kind: input, shape index: {}]
  %s7 = inlined_call_operand.hbm [shape: f32[128,128], index: 7, kind: input, shape index: {}]
  %s8 = inlined_call_operand.vmem [shape: f32[1,128], index: 8, kind: input, shape index: {}]
  %s9 = inlined_call_operand.hbm [shape: f32[128,128], index: 9, kind: input, shape index: {}]
  %s10 = inlined_call_operand.vmem [shape: f32[1,128], index: 10, kind: input, shape index: {}]
  %s11 = inlined_call_operand.vmem [shape: f32[2,128], index: 11, kind: output, shape index: {}]
  %s12 = sld [smem:[#allocation0]]
  $region70: #{gru_mod_forward.1} parent=0
    _
  %s14 = ssub.s32 1, %s12
  %s15 = scalar_select 0, %s14, %s12
  $region1: #{gru_mod_forward.1} parent=0
    #allocation2 [shape = 'u8[196608]{0}', space=vmem, size = 0x30000, scoped, tag = 'input window, operand 2, single buffered']
    #allocation3 [shape = 's32[1]{0}', space=sflag, size = 0x4, scoped, tag = 'scoped memory for gru_mod_forward.1']
    #allocation4 [shape = 'u8[65536]{0}', space=vmem, size = 0x10000, scoped, tag = 'input window, operand 5, single buffered']
    #allocation5 [shape = 's32[1]{0}', space=sflag, size = 0x4, scoped, tag = 'scoped memory for gru_mod_forward.1']
    #allocation6 [shape = 'u8[65536]{0}', space=vmem, size = 0x10000, scoped, tag = 'input window, operand 7, single buffered']
    #allocation7 [shape = 'u8[65536]{0}', space=vmem, size = 0x10000, scoped, tag = 'input window, operand 9, single buffered']
    #allocation8 [shape = 's32[1]{0}', space=sflag, size = 0x4, scoped, tag = 'scoped memory for gru_mod_forward.1']
    %16 = vsyncpa [#allocation3], 0
    %17 = vsyncpa [#allocation5], 0
    %18 = vsyncpa [#allocation8], 0
    // Predicated region
    $region2: #{gru_mod_forward.1} parent=1 // pred_check
      _
    $region3: #{gru_mod_forward.1} parent=1 // pred_check_branch
      %20 = sbr.rel (0) target = $region5
    $region4: #{gru_mod_forward.1} parent=1 // pred_region
      _
    $region5: #{gru_mod_forward.1} parent=1 // pred_fallthru
      _
    // Predicated region
    $region6: #{gru_mod_forward.1} parent=1 // pred_check
      _
    $region7: #{gru_mod_forward.1} parent=1 // pred_check_branch
      %22 = sbr.rel (0) target = $region9
    $region8: #{gru_mod_forward.1} parent=1 // pred_region
      _
    $region9: #{gru_mod_forward.1} parent=1 // pred_fallthru
      _
    // Predicated region
    $region10: #{gru_mod_forward.1} parent=1 // pred_check
      _
    $region11: #{gru_mod_forward.1} parent=1 // pred_check_branch
      %24 = sbr.rel (0) target = $region13
    $region12: #{gru_mod_forward.1} parent=1 // pred_region
      %s26 = ssub.s32 6144, 6144
      %27 = vsyncadd [#allocation3], %s26
      %s28 = sshll.u32 [#allocation2], 4
      %s29 = int_to_ptr.vmem [resolvable:$true] %s28
      %34 = dma.hbm_to_vmem [thread:$0]  %s2, 6144, %s29, [#allocation3], 384, 384, 24
    $region13: #{gru_mod_forward.1} parent=1 // pred_fallthru
      _
    // Predicated region
    $region14: #{gru_mod_forward.1} parent=1 // pred_check
      _
    $region15: #{gru_mod_forward.1} parent=1 // pred_check_branch
      %36 = sbr.rel (0) target = $region17
    $region16: #{gru_mod_forward.1} parent=1 // pred_region
      _
    $region17: #{gru_mod_forward.1} parent=1 // pred_fallthru
      _
    // Predicated region
    $region18: #{gru_mod_forward.1} parent=1 // pred_check
      _
    $region19: #{gru_mod_forward.1} parent=1 // pred_check_branch
      %38 = sbr.rel (0) target = $region21
    $region20: #{gru_mod_forward.1} parent=1 // pred_region
      _
    $region21: #{gru_mod_forward.1} parent=1 // pred_fallthru
      _
    // Predicated region
    $region22: #{gru_mod_forward.1} parent=1 // pred_check
      _
    $region23: #{gru_mod_forward.1} parent=1 // pred_check_branch
      %40 = sbr.rel (0) target = $region25
    $region24: #{gru_mod_forward.1} parent=1 // pred_region
      %s42 = ssub.s32 2048, 2048
      %43 = vsyncadd [#allocation5], %s42
      %s44 = sshll.u32 [#allocation4], 4
      %s45 = int_to_ptr.vmem [resolvable:$true] %s44
      %50 = dma.hbm_to_vmem [thread:$0]  %s5, 2048, %s45, [#allocation5], 128, 128, 8
    $region25: #{gru_mod_forward.1} parent=1 // pred_fallthru
      _
    // Predicated region
    $region26: #{gru_mod_forward.1} parent=1 // pred_check
      _
    $region27: #{gru_mod_forward.1} parent=1 // pred_check_branch
      %52 = sbr.rel (0) target = $region29
    $region28: #{gru_mod_forward.1} parent=1 // pred_region
      _
    $region29: #{gru_mod_forward.1} parent=1 // pred_fallthru
      _
    // Predicated region
    $region30: #{gru_mod_forward.1} parent=1 // pred_check
      _
    $region31: #{gru_mod_forward.1} parent=1 // pred_check_branch
      %54 = sbr.rel (0) target = $region33
    $region32: #{gru_mod_forward.1} parent=1 // pred_region
      %s56 = ssub.s32 2048, 2048
      %57 = vsyncadd [#allocation5], %s56
      %s58 = sshll.u32 [#allocation6], 4
      %s59 = int_to_ptr.vmem [resolvable:$true] %s58
      %64 = dma.hbm_to_vmem [thread:$0]  %s7, 2048, %s59, [#allocation5], 128, 128, 8
    $region33: #{gru_mod_forward.1} parent=1 // pred_fallthru
      _
    // Predicated region
    $region34: #{gru_mod_forward.1} parent=1 // pred_check
      _
    $region35: #{gru_mod_forward.1} parent=1 // pred_check_branch
      %66 = sbr.rel (0) target = $region37
    $region36: #{gru_mod_forward.1} parent=1 // pred_region
      _
    $region37: #{gru_mod_forward.1} parent=1 // pred_fallthru
      _
    // Predicated region
    $region38: #{gru_mod_forward.1} parent=1 // pred_check
      _
    $region39: #{gru_mod_forward.1} parent=1 // pred_check_branch
      %68 = sbr.rel (0) target = $region41
    $region40: #{gru_mod_forward.1} parent=1 // pred_region
      %s70 = ssub.s32 2048, 2048
      %71 = vsyncadd [#allocation8], %s70
      %s72 = sshll.u32 [#allocation7], 4
      %s73 = int_to_ptr.vmem [resolvable:$true] %s72
      %78 = dma.hbm_to_vmem [thread:$0]  %s9, 2048, %s73, [#allocation8], 128, 128, 8
    $region41: #{gru_mod_forward.1} parent=1 // pred_fallthru
      _
    // Predicated region
    $region42: #{gru_mod_forward.1} parent=1 // pred_check
      _
    $region43: #{gru_mod_forward.1} parent=1 // pred_check_branch
      %80 = sbr.rel (0) target = $region45
    $region44: #{gru_mod_forward.1} parent=1 // pred_region
      _
    $region45: #{gru_mod_forward.1} parent=1 // pred_fallthru
      _
    // Predicated region
    $region46: #{gru_mod_forward.1} parent=1 // pred_check
      _
    $region47: #{gru_mod_forward.1} parent=1 // pred_check_branch
      %82 = sbr.rel (0) target = $region49
    $region48: #{gru_mod_forward.1} parent=1 // pred_region
      %83 = dma.done [#allocation3], 6144
    $region49: #{gru_mod_forward.1} parent=1 // pred_fallthru
      _
    // Predicated region
    $region50: #{gru_mod_forward.1} parent=1 // pred_check
      _
    $region51: #{gru_mod_forward.1} parent=1 // pred_check_branch
      %85 = sbr.rel (0) target = $region53
    $region52: #{gru_mod_forward.1} parent=1 // pred_region
      %86 = dma.done [#allocation5], 2048
    $region53: #{gru_mod_forward.1} parent=1 // pred_fallthru
      _
    // Predicated region
    $region54: #{gru_mod_forward.1} parent=1 // pred_check
      _
    $region55: #{gru_mod_forward.1} parent=1 // pred_check_branch
      %88 = sbr.rel (0) target = $region57
    $region56: #{gru_mod_forward.1} parent=1 // pred_region
      %89 = dma.done [#allocation5], 2048
    $region57: #{gru_mod_forward.1} parent=1 // pred_fallthru
      _
    // Predicated region
    $region58: #{gru_mod_forward.1} parent=1 // pred_check
      _
    $region59: #{gru_mod_forward.1} parent=1 // pred_check_branch
      %91 = sbr.rel (0) target = $region61
    $region60: #{gru_mod_forward.1} parent=1 // pred_region
      %92 = dma.done [#allocation8], 2048
    $region61: #{gru_mod_forward.1} parent=1 // pred_fallthru
      _
    %v93 = vld [vmem:[%s0] sm:$0xff]
    %v94 = vld [vmem:[%s0 + $0x8] sm:$0xff]
    %v95 = vld [vmem:[%s1] sm:$0xff]
    %v96 = vld [vmem:[%s1 + $0x8] sm:$0xf]
    %v97 = vld [vmem:[%s3] sm:$0x7]
    %v99 = vlaneseq
    %v100 = vshrl.u32 %v99, 7
    %v101 = vsub.s32 0, %v100
    %v102 = vrot.slane %v97, %v101
    %v103 = vlaneseq
    %v104 = vshrl.u32 %v103, 7
    %v105 = vsub.s32 1, %v104
    %v106 = vrot.slane %v97, %v105
    %v107 = vlaneseq
    %v108 = vshrl.u32 %v107, 7
    %v109 = vsub.s32 2, %v108
    %v110 = vrot.slane %v97, %v109
    %v116 = vcombine.high %v95, %v95
    %vm117 = vcmask 31744
    %v119 = vsel %vm117, %v93, 0
    %v122 = vsel %vm117, %v94, 0
    %vm124 = vcmask 1043456
    %v125 = vsel %vm124, %v95, 0
    %v127 = vsel %vm124, %v116, 0
    %v129 = vsel %vm124, %v96, 0
    %131 = vmatprep.subr.mxu0 0.0
    %132 = vmatpush1.msra.mxu0 0.0
    %133 = vmatprep.subr.mxu0 0.0
    %134 = vmatpush1.msra.mxu0 0.0
    %135 = vmatprep.subr.mxu0 0.0
    %136 = vmatpush1.msra.mxu0 0.0
    %137 = vmatprep.subr.mxu0 0.0
    %138 = vmatpush1.msra.mxu0 0.0
    %139 = vmatprep.subr.mxu0 0.0
    %140 = vmatpush1.msra.mxu0 0.0
    %141 = vmatprep.subr.mxu0 0.0
    %142 = vmatpush1.msra.mxu0 0.0
    %143 = vmatprep.subr.mxu0 0.0
    %144 = vmatpush1.msra.mxu0 0.0
    %145 = vmatprep.subr.mxu0 0.0
    %146 = vmatpush1.msra.mxu0 0.0
    %147 = vmatprep.subr.mxu0 0.0
    %148 = vmatpush1.msra.mxu0 0.0
    %149 = vmatprep.subr.mxu0 0.0
    %150 = vmatpush1.msra.mxu0 0.0
    %151 = vmatprep.subr.mxu0 0.0
    %152 = vmatpush1.msra.mxu0 0.0
    %153 = vmatprep.subr.mxu0 0.0
    %154 = vmatpush1.msra.mxu0 0.0
    %155 = vmatprep.subr.mxu0 0.0
    %156 = vmatpush1.msra.mxu0 0.0
    %157 = vmatprep.subr.mxu0 0.0
    %158 = vmatpush1.msra.mxu0 0.0
    %159 = vmatprep.subr.mxu0 0.0
    %160 = vmatpush1.msra.mxu0 0.0
    %161 = vmatprep.subr.mxu0 %v127
    %162 = vmatpush1.msra.mxu0 %v125
    %163 = vmatprep.subr.mxu0 0.0
    %164 = vmatpush2.msra.mxu0 0.0
    %165 = vmatprep.subr.mxu0 0.0
    %166 = vmatpush2.msra.mxu0 0.0
    %167 = vmatprep.subr.mxu0 0.0
    %168 = vmatpush2.msra.mxu0 0.0
    %169 = vmatprep.subr.mxu0 0.0
    %170 = vmatpush2.msra.mxu0 0.0
    %171 = vmatprep.subr.mxu0 0.0
    %172 = vmatpush2.msra.mxu0 0.0
    %173 = vmatprep.subr.mxu0 0.0
    %174 = vmatpush2.msra.mxu0 0.0
    %175 = vmatprep.subr.mxu0 0.0
    %176 = vmatpush2.msra.mxu0 0.0
    %177 = vmatprep.subr.mxu0 0.0
    %178 = vmatpush2.msra.mxu0 0.0
    %179 = vmatprep.subr.mxu0 0.0
    %180 = vmatpush2.msra.mxu0 0.0
    %181 = vmatprep.subr.mxu0 0.0
    %182 = vmatpush2.msra.mxu0 0.0
    %183 = vmatprep.subr.mxu0 0.0
    %184 = vmatpush2.msra.mxu0 0.0
    %185 = vmatprep.subr.mxu0 0.0
    %186 = vmatpush2.msra.mxu0 0.0
    %187 = vmatprep.subr.mxu0 0.0
    %188 = vmatpush2.msra.mxu0 0.0
    %189 = vmatprep.subr.mxu0 0.0
    %190 = vmatpush2.msra.mxu0 0.0
    %191 = vmatprep.subr.mxu0 0.0
    %192 = vmatpush2.msra.mxu0 0.0
    %193 = vmatprep.subr.mxu0 0.0
    %194 = vmatpush2.msra.mxu0 0.0
    %195 = vmatprep.mubr.f32.mxu0 0.0
    %196 = vmatmul.mubr.f32.gmra.mxu0 %v119
    %v197 = vpop.f32.mrf.mxu0
    %v198 = vadd.f32 %v102, %v197
    %v199 = vpop.f32.mrf.mxu0
    %v200 = vadd.f32 %v106, %v199
    %201 = vmatprep.mubr.f32.mxu0 0.0
    %202 = vmatmul.mubr.f32.gmra.mxu0 %v122
    %v203 = vpop.f32.mrf.mxu0
    %v204 = vadd.f32 %v102, %v203
    %v205 = vpop.f32.mrf.mxu0
    %v206 = vadd.f32 %v106, %v205
    %207 = vdwg.mxu0
    %208 = vmatprep.subr.mxu0 0.0
    %209 = vmatpush1.msra.mxu0 0.0
    %210 = vmatprep.subr.mxu0 0.0
    %211 = vmatpush1.msra.mxu0 0.0
    %212 = vmatprep.subr.mxu0 0.0
    %213 = vmatpush1.msra.mxu0 0.0
    %214 = vmatprep.subr.mxu0 0.0
    %215 = vmatpush1.msra.mxu0 0.0
    %216 = vmatprep.subr.mxu0 0.0
    %217 = vmatpush1.msra.mxu0 0.0
    %218 = vmatprep.subr.mxu0 0.0
    %219 = vmatpush1.msra.mxu0 0.0
    %220 = vmatprep.subr.mxu0 0.0
    %221 = vmatpush1.msra.mxu0 0.0
    %222 = vmatprep.subr.mxu0 0.0
    %223 = vmatpush1.msra.mxu0 0.0
    %224 = vmatprep.subr.mxu0 0.0
    %225 = vmatpush1.msra.mxu0 0.0
    %226 = vmatprep.subr.mxu0 0.0
    %227 = vmatpush1.msra.mxu0 0.0
    %228 = vmatprep.subr.mxu0 0.0
    %229 = vmatpush1.msra.mxu0 0.0
    %230 = vmatprep.subr.mxu0 0.0
    %231 = vmatpush1.msra.mxu0 0.0
    %232 = vmatprep.subr.mxu0 0.0
    %233 = vmatpush1.msra.mxu0 0.0
    %234 = vmatprep.subr.mxu0 0.0
    %235 = vmatpush1.msra.mxu0 0.0
    %236 = vmatprep.subr.mxu0 0.0
    %237 = vmatpush1.msra.mxu0 0.0
    %238 = vmatprep.subr.mxu0 0.0
    %239 = vmatpush1.msra.mxu0 %v129
    %240 = vmatprep.subr.mxu0 0.0
    %241 = vmatpush2.msra.mxu0 0.0
    %242 = vmatprep.subr.mxu0 0.0
    %243 = vmatpush2.msra.mxu0 0.0
    %244 = vmatprep.subr.mxu0 0.0
    %245 = vmatpush2.msra.mxu0 0.0
    %246 = vmatprep.subr.mxu0 0.0
    %247 = vmatpush2.msra.mxu0 0.0
    %248 = vmatprep.subr.mxu0 0.0
    %249 = vmatpush2.msra.mxu0 0.0
    %250 = vmatprep.subr.mxu0 0.0
    %251 = vmatpush2.msra.mxu0 0.0
    %252 = vmatprep.subr.mxu0 0.0
    %253 = vmatpush2.msra.mxu0 0.0
    %254 = vmatprep.subr.mxu0 0.0
    %255 = vmatpush2.msra.mxu0 0.0
    %256 = vmatprep.subr.mxu0 0.0
    %257 = vmatpush2.msra.mxu0 0.0
    %258 = vmatprep.subr.mxu0 0.0
    %259 = vmatpush2.msra.mxu0 0.0
    %260 = vmatprep.subr.mxu0 0.0
    %261 = vmatpush2.msra.mxu0 0.0
    %262 = vmatprep.subr.mxu0 0.0
    %263 = vmatpush2.msra.mxu0 0.0
    %264 = vmatprep.subr.mxu0 0.0
    %265 = vmatpush2.msra.mxu0 0.0
    %266 = vmatprep.subr.mxu0 0.0
    %267 = vmatpush2.msra.mxu0 0.0
    %268 = vmatprep.subr.mxu0 0.0
    %269 = vmatpush2.msra.mxu0 0.0
    %270 = vmatprep.subr.mxu0 0.0
    %271 = vmatpush2.msra.mxu0 0.0
    %272 = vmatprep.mubr.f32.mxu0 0.0
    %273 = vmatmul.mubr.f32.gmra.mxu0 %v119
    %v274 = vpop.f32.mrf.mxu0
    %v275 = vadd.f32 %v110, %v274
    %v276 = vpop.f32.mrf.mxu0
    %277 = vmatprep.mubr.f32.mxu0 0.0
    %278 = vmatmul.mubr.f32.gmra.mxu0 %v122
    %v279 = vpop.f32.mrf.mxu0
    %v280 = vadd.f32 %v110, %v279
    %v281 = vpop.f32.mrf.mxu0
    %282 = vdwg.mxu0
    %v283 = vld [vmem:[#allocation2] sm:$0xff]
    %v284 = vld [vmem:[#allocation2 + $0x8] sm:$0xff]
    %v285 = vld [vmem:[#allocation2 + $0x10] sm:$0xff]
    %v286 = vld [vmem:[#allocation2 + $0x18] sm:$0xff]
    %v287 = vld [vmem:[#allocation2 + $0x20] sm:$0xff]
    %v288 = vld [vmem:[#allocation2 + $0x28] sm:$0xff]
    %v289 = vld [vmem:[#allocation2 + $0x30] sm:$0xff]
    %v290 = vld [vmem:[#allocation2 + $0x38] sm:$0xff]
    %v291 = vld [vmem:[#allocation2 + $0x40] sm:$0xff]
    %v292 = vld [vmem:[#allocation2 + $0x48] sm:$0xff]
    %v293 = vld [vmem:[#allocation2 + $0x50] sm:$0xff]
    %v294 = vld [vmem:[#allocation2 + $0x58] sm:$0xff]
    %v295 = vld [vmem:[#allocation2 + $0x60] sm:$0xff]
    %v296 = vld [vmem:[#allocation2 + $0x68] sm:$0xff]
    %v297 = vld [vmem:[#allocation2 + $0x70] sm:$0xff]
    %v298 = vld [vmem:[#allocation2 + $0x78] sm:$0xff]
    %v299 = vld [vmem:[#allocation2 + $0x80] sm:$0xff]
    %v300 = vld [vmem:[#allocation2 + $0x88] sm:$0xff]
    %v301 = vld [vmem:[#allocation2 + $0x90] sm:$0xff]
    %v302 = vld [vmem:[#allocation2 + $0x98] sm:$0xff]
    %v303 = vld [vmem:[#allocation2 + $0xa0] sm:$0xff]
    %v304 = vld [vmem:[#allocation2 + $0xa8] sm:$0xff]
    %v305 = vld [vmem:[#allocation2 + $0xb0] sm:$0xff]
    %v306 = vld [vmem:[#allocation2 + $0xb8] sm:$0xff]
    %v307 = vld [vmem:[#allocation2 + $0xc0] sm:$0xff]
    %v308 = vld [vmem:[#allocation2 + $0xc8] sm:$0xff]
    %v309 = vld [vmem:[#allocation2 + $0xd0] sm:$0xff]
    %v310 = vld [vmem:[#allocation2 + $0xd8] sm:$0xff]
    %v311 = vld [vmem:[#allocation2 + $0xe0] sm:$0xff]
    %v312 = vld [vmem:[#allocation2 + $0xe8] sm:$0xff]
    %v313 = vld [vmem:[#allocation2 + $0xf0] sm:$0xff]
    %v314 = vld [vmem:[#allocation2 + $0xf8] sm:$0xff]
    %v315 = vld [vmem:[#allocation2 + $0x100] sm:$0xff]
    %v316 = vld [vmem:[#allocation2 + $0x108] sm:$0xff]
    %v317 = vld [vmem:[#allocation2 + $0x110] sm:$0xff]
    %v318 = vld [vmem:[#allocation2 + $0x118] sm:$0xff]
    %v319 = vld [vmem:[#allocation2 + $0x120] sm:$0xff]
    %v320 = vld [vmem:[#allocation2 + $0x128] sm:$0xff]
    %v321 = vld [vmem:[#allocation2 + $0x130] sm:$0xff]
    %v322 = vld [vmem:[#allocation2 + $0x138] sm:$0xff]
    %v323 = vld [vmem:[#allocation2 + $0x140] sm:$0xff]
    %v324 = vld [vmem:[#allocation2 + $0x148] sm:$0xff]
    %v325 = vld [vmem:[#allocation2 + $0x150] sm:$0xff]
    %v326 = vld [vmem:[#allocation2 + $0x158] sm:$0xff]
    %v327 = vld [vmem:[#allocation2 + $0x160] sm:$0xff]
    %v328 = vld [vmem:[#allocation2 + $0x168] sm:$0xff]
    %v329 = vld [vmem:[#allocation2 + $0x170] sm:$0xff]
    %v330 = vld [vmem:[#allocation2 + $0x178] sm:$0xff]
    %v331 = vld [vmem:[%s4] sm:$0x1]
    %v335 = vrot.slane %v204, 7
    %v336 = vrot.slane %v206, 7
    %v337 = vrot.slane %v280, 7
    %vm341 = vcmask 1040384
    %v342 = vsel %vm341, %v198, %v335
    %v343 = vsel %vm341, %v200, %v336
    %v344 = vsel %vm341, %v275, %v337
    %345 = vmatprep.subr.mxu0 %v329
    %346 = vmatpush1.msra.mxu0 %v328
    %347 = vmatprep.subr.mxu0 %v326
    %348 = vmatpush1.msra.mxu0 %v325
    %349 = vmatprep.subr.mxu0 %v323
    %350 = vmatpush1.msra.mxu0 %v322
    %351 = vmatprep.subr.mxu0 %v320
    %352 = vmatpush1.msra.mxu0 %v319
    %353 = vmatprep.subr.mxu0 %v317
    %354 = vmatpush1.msra.mxu0 %v316
    %355 = vmatprep.subr.mxu0 %v314
    %356 = vmatpush1.msra.mxu0 %v313
    %357 = vmatprep.subr.mxu0 %v311
    %358 = vmatpush1.msra.mxu0 %v310
    %359 = vmatprep.subr.mxu0 %v308
    %360 = vmatpush1.msra.mxu0 %v307
    %361 = vmatprep.subr.mxu0 %v305
    %362 = vmatpush1.msra.mxu0 %v304
    %363 = vmatprep.subr.mxu0 %v302
    %364 = vmatpush1.msra.mxu0 %v301
    %365 = vmatprep.subr.mxu0 %v299
    %366 = vmatpush1.msra.mxu0 %v298
    %367 = vmatprep.subr.mxu0 %v296
    %368 = vmatpush1.msra.mxu0 %v295
    %369 = vmatprep.subr.mxu0 %v293
    %370 = vmatpush1.msra.mxu0 %v292
    %371 = vmatprep.subr.mxu0 %v290
    %372 = vmatpush1.msra.mxu0 %v289
    %373 = vmatprep.subr.mxu0 %v287
    %374 = vmatpush1.msra.mxu0 %v286
    %375 = vmatprep.subr.mxu0 %v284
    %376 = vmatpush1.msra.mxu0 %v283
    %377 = vmatprep.subr.mxu0 0.0
    %378 = vmatpush2.msra.mxu0 0.0
    %379 = vmatprep.subr.mxu0 0.0
    %380 = vmatpush2.msra.mxu0 0.0
    %381 = vmatprep.subr.mxu0 0.0
    %382 = vmatpush2.msra.mxu0 0.0
    %383 = vmatprep.subr.mxu0 0.0
    %384 = vmatpush2.msra.mxu0 0.0
    %385 = vmatprep.subr.mxu0 0.0
    %386 = vmatpush2.msra.mxu0 0.0
    %387 = vmatprep.subr.mxu0 0.0
    %388 = vmatpush2.msra.mxu0 0.0
    %389 = vmatprep.subr.mxu0 0.0
    %390 = vmatpush2.msra.mxu0 0.0
    %391 = vmatprep.subr.mxu0 0.0
    %392 = vmatpush2.msra.mxu0 0.0
    %393 = vmatprep.subr.mxu0 0.0
    %394 = vmatpush2.msra.mxu0 0.0
    %395 = vmatprep.subr.mxu0 0.0
    %396 = vmatpush2.msra.mxu0 0.0
    %397 = vmatprep.subr.mxu0 0.0
    %398 = vmatpush2.msra.mxu0 0.0
    %399 = vmatprep.subr.mxu0 0.0
    %400 = vmatpush2.msra.mxu0 0.0
    %401 = vmatprep.subr.mxu0 0.0
    %402 = vmatpush2.msra.mxu0 0.0
    %403 = vmatprep.subr.mxu0 0.0
    %404 = vmatpush2.msra.mxu0 0.0
    %405 = vmatprep.subr.mxu0 0.0
    %406 = vmatpush2.msra.mxu0 0.0
    %407 = vmatprep.subr.mxu0 0.0
    %408 = vmatpush2.msra.mxu0 0.0
    %409 = vmatprep.mubr.f32.mxu0 0.0
    %410 = vmatmul.mubr.f32.gmra.mxu0 0.0
    %v411 = vpop.f32.mrf.mxu0
    %v412 = vadd.f32 0.0, %v411
    %v413 = vpop.f32.mrf.mxu0
    %v414 = vadd.f32 0.0, %v413
    %415 = vdwg.mxu0
    %416 = vmatprep.subr.mxu0 0.0
    %417 = vmatpush1.msra.mxu0 %v330
    %418 = vmatprep.subr.mxu0 0.0
    %419 = vmatpush1.msra.mxu0 %v327
    %420 = vmatprep.subr.mxu0 0.0
    %421 = vmatpush1.msra.mxu0 %v324
    %422 = vmatprep.subr.mxu0 0.0
    %423 = vmatpush1.msra.mxu0 %v321
    %424 = vmatprep.subr.mxu0 0.0
    %425 = vmatpush1.msra.mxu0 %v318
    %426 = vmatprep.subr.mxu0 0.0
    %427 = vmatpush1.msra.mxu0 %v315
    %428 = vmatprep.subr.mxu0 0.0
    %429 = vmatpush1.msra.mxu0 %v312
    %430 = vmatprep.subr.mxu0 0.0
    %431 = vmatpush1.msra.mxu0 %v309
    %432 = vmatprep.subr.mxu0 0.0
    %433 = vmatpush1.msra.mxu0 %v306
    %434 = vmatprep.subr.mxu0 0.0
    %435 = vmatpush1.msra.mxu0 %v303
    %436 = vmatprep.subr.mxu0 0.0
    %437 = vmatpush1.msra.mxu0 %v300
    %438 = vmatprep.subr.mxu0 0.0
    %439 = vmatpush1.msra.mxu0 %v297
    %440 = vmatprep.subr.mxu0 0.0
    %441 = vmatpush1.msra.mxu0 %v294
    %442 = vmatprep.subr.mxu0 0.0
    %443 = vmatpush1.msra.mxu0 %v291
    %444 = vmatprep.subr.mxu0 0.0
    %445 = vmatpush1.msra.mxu0 %v288
    %446 = vmatprep.subr.mxu0 0.0
    %447 = vmatpush1.msra.mxu0 %v285
    %448 = vmatprep.subr.mxu0 0.0
    %449 = vmatpush2.msra.mxu0 0.0
    %450 = vmatprep.subr.mxu0 0.0
    %451 = vmatpush2.msra.mxu0 0.0
    %452 = vmatprep.subr.mxu0 0.0
    %453 = vmatpush2.msra.mxu0 0.0
    %454 = vmatprep.subr.mxu0 0.0
    %455 = vmatpush2.msra.mxu0 0.0
    %456 = vmatprep.subr.mxu0 0.0
    %457 = vmatpush2.msra.mxu0 0.0
    %458 = vmatprep.subr.mxu0 0.0
    %459 = vmatpush2.msra.mxu0 0.0
    %460 = vmatprep.subr.mxu0 0.0
    %461 = vmatpush2.msra.mxu0 0.0
    %462 = vmatprep.subr.mxu0 0.0
    %463 = vmatpush2.msra.mxu0 0.0
    %464 = vmatprep.subr.mxu0 0.0
    %465 = vmatpush2.msra.mxu0 0.0
    %466 = vmatprep.subr.mxu0 0.0
    %467 = vmatpush2.msra.mxu0 0.0
    %468 = vmatprep.subr.mxu0 0.0
    %469 = vmatpush2.msra.mxu0 0.0
    %470 = vmatprep.subr.mxu0 0.0
    %471 = vmatpush2.msra.mxu0 0.0
    %472 = vmatprep.subr.mxu0 0.0
    %473 = vmatpush2.msra.mxu0 0.0
    %474 = vmatprep.subr.mxu0 0.0
    %475 = vmatpush2.msra.mxu0 0.0
    %476 = vmatprep.subr.mxu0 0.0
    %477 = vmatpush2.msra.mxu0 0.0
    %478 = vmatprep.subr.mxu0 0.0
    %479 = vmatpush2.msra.mxu0 0.0
    %480 = vmatprep.mubr.f32.mxu0 0.0
    %481 = vmatmul.mubr.f32.gmra.mxu0 0.0
    %v482 = vpop.f32.mrf.mxu0
    %v483 = vadd.f32 0.0, %v482
    %v484 = vpop.f32.mrf.mxu0
    %485 = vdwg.mxu0
    %v486 = vadd.f32 %v342, %v412
    %v487 = vmul.f32 %v486, 0.5
    %v488 = vtanh.pop %v487
    %v489 = vmul.f32 %v488, 0.5
    %v490 = vadd.f32 %v489, 0.5
    %v491 = vadd.f32 %v343, %v414
    %v492 = vmul.f32 %v491, 0.5
    %v493 = vtanh.pop %v492
    %v494 = vmul.f32 %v493, 0.5
    %v495 = vadd.f32 %v494, 0.5
    %v497 = vlaneseq
    %v498 = vshrl.u32 %v497, 7
    %v499 = vsub.s32 0, %v498
    %v500 = vrot.slane %v331, %v499
    %v502 = vadd.f32 %v483, %v500
    %v503 = vmul.f32 %v490, %v502
    %v504 = vadd.f32 %v344, %v503
    %v505 = vtanh.pop %v504
    %v506 = vsub.f32 1.0, %v495
    %v507 = vmul.f32 %v506, %v505
    %v508 = vmul.f32 %v495, 0.0
    %v509 = vadd.f32 %v507, %v508
    %v513 = vrot.slane %v198, 1
    %v514 = vrot.slane %v200, 1
    %v515 = vrot.slane %v275, 1
    %v519 = vsel %vm341, %v513, %v204
    %v520 = vsel %vm341, %v514, %v206
    %v521 = vsel %vm341, %v515, %v280
    %522 = vmatprep.subr.mxu0 %v329
    %523 = vmatpush1.msra.mxu0 %v328
    %524 = vmatprep.subr.mxu0 %v326
    %525 = vmatpush1.msra.mxu0 %v325
    %526 = vmatprep.subr.mxu0 %v323
    %527 = vmatpush1.msra.mxu0 %v322
    %528 = vmatprep.subr.mxu0 %v320
    %529 = vmatpush1.msra.mxu0 %v319
    %530 = vmatprep.subr.mxu0 %v317
    %531 = vmatpush1.msra.mxu0 %v316
    %532 = vmatprep.subr.mxu0 %v314
    %533 = vmatpush1.msra.mxu0 %v313
    %534 = vmatprep.subr.mxu0 %v311
    %535 = vmatpush1.msra.mxu0 %v310
    %536 = vmatprep.subr.mxu0 %v308
    %537 = vmatpush1.msra.mxu0 %v307
    %538 = vmatprep.subr.mxu0 %v305
    %539 = vmatpush1.msra.mxu0 %v304
    %540 = vmatprep.subr.mxu0 %v302
    %541 = vmatpush1.msra.mxu0 %v301
    %542 = vmatprep.subr.mxu0 %v299
    %543 = vmatpush1.msra.mxu0 %v298
    %544 = vmatprep.subr.mxu0 %v296
    %545 = vmatpush1.msra.mxu0 %v295
    %546 = vmatprep.subr.mxu0 %v293
    %547 = vmatpush1.msra.mxu0 %v292
    %548 = vmatprep.subr.mxu0 %v290
    %549 = vmatpush1.msra.mxu0 %v289
    %550 = vmatprep.subr.mxu0 %v287
    %551 = vmatpush1.msra.mxu0 %v286
    %552 = vmatprep.subr.mxu0 %v284
    %553 = vmatpush1.msra.mxu0 %v283
    %554 = vmatprep.subr.mxu0 0.0
    %555 = vmatpush2.msra.mxu0 0.0
    %556 = vmatprep.subr.mxu0 0.0
    %557 = vmatpush2.msra.mxu0 0.0
    %558 = vmatprep.subr.mxu0 0.0
    %559 = vmatpush2.msra.mxu0 0.0
    %560 = vmatprep.subr.mxu0 0.0
    %561 = vmatpush2.msra.mxu0 0.0
    %562 = vmatprep.subr.mxu0 0.0
    %563 = vmatpush2.msra.mxu0 0.0
    %564 = vmatprep.subr.mxu0 0.0
    %565 = vmatpush2.msra.mxu0 0.0
    %566 = vmatprep.subr.mxu0 0.0
    %567 = vmatpush2.msra.mxu0 0.0
    %568 = vmatprep.subr.mxu0 0.0
    %569 = vmatpush2.msra.mxu0 0.0
    %570 = vmatprep.subr.mxu0 0.0
    %571 = vmatpush2.msra.mxu0 0.0
    %572 = vmatprep.subr.mxu0 0.0
    %573 = vmatpush2.msra.mxu0 0.0
    %574 = vmatprep.subr.mxu0 0.0
    %575 = vmatpush2.msra.mxu0 0.0
    %576 = vmatprep.subr.mxu0 0.0
    %577 = vmatpush2.msra.mxu0 0.0
    %578 = vmatprep.subr.mxu0 0.0
    %579 = vmatpush2.msra.mxu0 0.0
    %580 = vmatprep.subr.mxu0 0.0
    %581 = vmatpush2.msra.mxu0 0.0
    %582 = vmatprep.subr.mxu0 0.0
    %583 = vmatpush2.msra.mxu0 0.0
    %584 = vmatprep.subr.mxu0 0.0
    %585 = vmatpush2.msra.mxu0 0.0
    %586 = vmatprep.mubr.f32.mxu0 0.0
    %587 = vmatmul.mubr.f32.gmra.mxu0 %v509
    %v588 = vpop.f32.mrf.mxu0
    %v589 = vadd.f32 0.0, %v588
    %v590 = vpop.f32.mrf.mxu0
    %v591 = vadd.f32 0.0, %v590
    %592 = vdwg.mxu0
    %593 = vmatprep.subr.mxu0 0.0
    %594 = vmatpush1.msra.mxu0 %v330
    %595 = vmatprep.subr.mxu0 0.0
    %596 = vmatpush1.msra.mxu0 %v327
    %597 = vmatprep.subr.mxu0 0.0
    %598 = vmatpush1.msra.mxu0 %v324
    %599 = vmatprep.subr.mxu0 0.0
    %600 = vmatpush1.msra.mxu0 %v321
    %601 = vmatprep.subr.mxu0 0.0
    %602 = vmatpush1.msra.mxu0 %v318
    %603 = vmatprep.subr.mxu0 0.0
    %604 = vmatpush1.msra.mxu0 %v315
    %605 = vmatprep.subr.mxu0 0.0
    %606 = vmatpush1.msra.mxu0 %v312
    %607 = vmatprep.subr.mxu0 0.0
    %608 = vmatpush1.msra.mxu0 %v309
    %609 = vmatprep.subr.mxu0 0.0
    %610 = vmatpush1.msra.mxu0 %v306
    %611 = vmatprep.subr.mxu0 0.0
    %612 = vmatpush1.msra.mxu0 %v303
    %613 = vmatprep.subr.mxu0 0.0
    %614 = vmatpush1.msra.mxu0 %v300
    %615 = vmatprep.subr.mxu0 0.0
    %616 = vmatpush1.msra.mxu0 %v297
    %617 = vmatprep.subr.mxu0 0.0
    %618 = vmatpush1.msra.mxu0 %v294
    %619 = vmatprep.subr.mxu0 0.0
    %620 = vmatpush1.msra.mxu0 %v291
    %621 = vmatprep.subr.mxu0 0.0
    %622 = vmatpush1.msra.mxu0 %v288
    %623 = vmatprep.subr.mxu0 0.0
    %624 = vmatpush1.msra.mxu0 %v285
    %625 = vmatprep.subr.mxu0 0.0
    %626 = vmatpush2.msra.mxu0 0.0
    %627 = vmatprep.subr.mxu0 0.0
    %628 = vmatpush2.msra.mxu0 0.0
    %629 = vmatprep.subr.mxu0 0.0
    %630 = vmatpush2.msra.mxu0 0.0
    %631 = vmatprep.subr.mxu0 0.0
    %632 = vmatpush2.msra.mxu0 0.0
    %633 = vmatprep.subr.mxu0 0.0
    %634 = vmatpush2.msra.mxu0 0.0
    %635 = vmatprep.subr.mxu0 0.0
    %636 = vmatpush2.msra.mxu0 0.0
    %637 = vmatprep.subr.mxu0 0.0
    %638 = vmatpush2.msra.mxu0 0.0
    %639 = vmatprep.subr.mxu0 0.0
    %640 = vmatpush2.msra.mxu0 0.0
    %641 = vmatprep.subr.mxu0 0.0
    %642 = vmatpush2.msra.mxu0 0.0
    %643 = vmatprep.subr.mxu0 0.0
    %644 = vmatpush2.msra.mxu0 0.0
    %645 = vmatprep.subr.mxu0 0.0
    %646 = vmatpush2.msra.mxu0 0.0
    %647 = vmatprep.subr.mxu0 0.0
    %648 = vmatpush2.msra.mxu0 0.0
    %649 = vmatprep.subr.mxu0 0.0
    %650 = vmatpush2.msra.mxu0 0.0
    %651 = vmatprep.subr.mxu0 0.0
    %652 = vmatpush2.msra.mxu0 0.0
    %653 = vmatprep.subr.mxu0 0.0
    %654 = vmatpush2.msra.mxu0 0.0
    %655 = vmatprep.subr.mxu0 0.0
    %656 = vmatpush2.msra.mxu0 0.0
    %657 = vmatprep.mubr.f32.mxu0 0.0
    %658 = vmatmul.mubr.f32.gmra.mxu0 %v509
    %v659 = vpop.f32.mrf.mxu0
    %v660 = vadd.f32 0.0, %v659
    %v661 = vpop.f32.mrf.mxu0
    %662 = vdwg.mxu0
    %v663 = vadd.f32 %v519, %v589
    %v664 = vmul.f32 %v663, 0.5
    %v665 = vtanh.pop %v664
    %v666 = vmul.f32 %v665, 0.5
    %v667 = vadd.f32 %v666, 0.5
    %v668 = vadd.f32 %v520, %v591
    %v669 = vmul.f32 %v668, 0.5
    %v670 = vtanh.pop %v669
    %v671 = vmul.f32 %v670, 0.5
    %v672 = vadd.f32 %v671, 0.5
    %v673 = vadd.f32 %v660, %v500
    %v674 = vmul.f32 %v667, %v673
    %v675 = vadd.f32 %v521, %v674
    %v676 = vtanh.pop %v675
    %v677 = vsub.f32 1.0, %v672
    %v678 = vmul.f32 %v677, %v676
    %v679 = vmul.f32 %v672, %v509
    %v680 = vadd.f32 %v678, %v679
    %v681 = vrot.slane %v198, 2
    %v682 = vrot.slane %v200, 2
    %v683 = vrot.slane %v275, 2
    %v687 = vrot.slane %v204, 1
    %v688 = vrot.slane %v206, 1
    %v689 = vrot.slane %v280, 1
    %v693 = vsel %vm341, %v681, %v687
    %v694 = vsel %vm341, %v682, %v688
    %v695 = vsel %vm341, %v683, %v689
    %696 = vmatprep.subr.mxu0 %v329
    %697 = vmatpush1.msra.mxu0 %v328
    %698 = vmatprep.subr.mxu0 %v326
    %699 = vmatpush1.msra.mxu0 %v325
    %700 = vmatprep.subr.mxu0 %v323
    %701 = vmatpush1.msra.mxu0 %v322
    %702 = vmatprep.subr.mxu0 %v320
    %703 = vmatpush1.msra.mxu0 %v319
    %704 = vmatprep.subr.mxu0 %v317
    %705 = vmatpush1.msra.mxu0 %v316
    %706 = vmatprep.subr.mxu0 %v314
    %707 = vmatpush1.msra.mxu0 %v313
    %708 = vmatprep.subr.mxu0 %v311
    %709 = vmatpush1.msra.mxu0 %v310
    %710 = vmatprep.subr.mxu0 %v308
    %711 = vmatpush1.msra.mxu0 %v307
    %712 = vmatprep.subr.mxu0 %v305
    %713 = vmatpush1.msra.mxu0 %v304
    %714 = vmatprep.subr.mxu0 %v302
    %715 = vmatpush1.msra.mxu0 %v301
    %716 = vmatprep.subr.mxu0 %v299
    %717 = vmatpush1.msra.mxu0 %v298
    %718 = vmatprep.subr.mxu0 %v296
    %719 = vmatpush1.msra.mxu0 %v295
    %720 = vmatprep.subr.mxu0 %v293
    %721 = vmatpush1.msra.mxu0 %v292
    %722 = vmatprep.subr.mxu0 %v290
    %723 = vmatpush1.msra.mxu0 %v289
    %724 = vmatprep.subr.mxu0 %v287
    %725 = vmatpush1.msra.mxu0 %v286
    %726 = vmatprep.subr.mxu0 %v284
    %727 = vmatpush1.msra.mxu0 %v283
    %728 = vmatprep.subr.mxu0 0.0
    %729 = vmatpush2.msra.mxu0 0.0
    %730 = vmatprep.subr.mxu0 0.0
    %731 = vmatpush2.msra.mxu0 0.0
    %732 = vmatprep.subr.mxu0 0.0
    %733 = vmatpush2.msra.mxu0 0.0
    %734 = vmatprep.subr.mxu0 0.0
    %735 = vmatpush2.msra.mxu0 0.0
    %736 = vmatprep.subr.mxu0 0.0
    %737 = vmatpush2.msra.mxu0 0.0
    %738 = vmatprep.subr.mxu0 0.0
    %739 = vmatpush2.msra.mxu0 0.0
    %740 = vmatprep.subr.mxu0 0.0
    %741 = vmatpush2.msra.mxu0 0.0
    %742 = vmatprep.subr.mxu0 0.0
    %743 = vmatpush2.msra.mxu0 0.0
    %744 = vmatprep.subr.mxu0 0.0
    %745 = vmatpush2.msra.mxu0 0.0
    %746 = vmatprep.subr.mxu0 0.0
    %747 = vmatpush2.msra.mxu0 0.0
    %748 = vmatprep.subr.mxu0 0.0
    %749 = vmatpush2.msra.mxu0 0.0
    %750 = vmatprep.subr.mxu0 0.0
    %751 = vmatpush2.msra.mxu0 0.0
    %752 = vmatprep.subr.mxu0 0.0
    %753 = vmatpush2.msra.mxu0 0.0
    %754 = vmatprep.subr.mxu0 0.0
    %755 = vmatpush2.msra.mxu0 0.0
    %756 = vmatprep.subr.mxu0 0.0
    %757 = vmatpush2.msra.mxu0 0.0
    %758 = vmatprep.subr.mxu0 0.0
    %759 = vmatpush2.msra.mxu0 0.0
    %760 = vmatprep.mubr.f32.mxu0 0.0
    %761 = vmatmul.mubr.f32.gmra.mxu0 %v680
    %v762 = vpop.f32.mrf.mxu0
    %v763 = vadd.f32 0.0, %v762
    %v764 = vpop.f32.mrf.mxu0
    %v765 = vadd.f32 0.0, %v764
    %766 = vdwg.mxu0
    %767 = vmatprep.subr.mxu0 0.0
    %768 = vmatpush1.msra.mxu0 %v330
    %769 = vmatprep.subr.mxu0 0.0
    %770 = vmatpush1.msra.mxu0 %v327
    %771 = vmatprep.subr.mxu0 0.0
    %772 = vmatpush1.msra.mxu0 %v324
    %773 = vmatprep.subr.mxu0 0.0
    %774 = vmatpush1.msra.mxu0 %v321
    %775 = vmatprep.subr.mxu0 0.0
    %776 = vmatpush1.msra.mxu0 %v318
    %777 = vmatprep.subr.mxu0 0.0
    %778 = vmatpush1.msra.mxu0 %v315
    %779 = vmatprep.subr.mxu0 0.0
    %780 = vmatpush1.msra.mxu0 %v312
    %781 = vmatprep.subr.mxu0 0.0
    %782 = vmatpush1.msra.mxu0 %v309
    %783 = vmatprep.subr.mxu0 0.0
    %784 = vmatpush1.msra.mxu0 %v306
    %785 = vmatprep.subr.mxu0 0.0
    %786 = vmatpush1.msra.mxu0 %v303
    %787 = vmatprep.subr.mxu0 0.0
    %788 = vmatpush1.msra.mxu0 %v300
    %789 = vmatprep.subr.mxu0 0.0
    %790 = vmatpush1.msra.mxu0 %v297
    %791 = vmatprep.subr.mxu0 0.0
    %792 = vmatpush1.msra.mxu0 %v294
    %793 = vmatprep.subr.mxu0 0.0
    %794 = vmatpush1.msra.mxu0 %v291
    %795 = vmatprep.subr.mxu0 0.0
    %796 = vmatpush1.msra.mxu0 %v288
    %797 = vmatprep.subr.mxu0 0.0
    %798 = vmatpush1.msra.mxu0 %v285
    %799 = vmatprep.subr.mxu0 0.0
    %800 = vmatpush2.msra.mxu0 0.0
    %801 = vmatprep.subr.mxu0 0.0
    %802 = vmatpush2.msra.mxu0 0.0
    %803 = vmatprep.subr.mxu0 0.0
    %804 = vmatpush2.msra.mxu0 0.0
    %805 = vmatprep.subr.mxu0 0.0
    %806 = vmatpush2.msra.mxu0 0.0
    %807 = vmatprep.subr.mxu0 0.0
    %808 = vmatpush2.msra.mxu0 0.0
    %809 = vmatprep.subr.mxu0 0.0
    %810 = vmatpush2.msra.mxu0 0.0
    %811 = vmatprep.subr.mxu0 0.0
    %812 = vmatpush2.msra.mxu0 0.0
    %813 = vmatprep.subr.mxu0 0.0
    %814 = vmatpush2.msra.mxu0 0.0
    %815 = vmatprep.subr.mxu0 0.0
    %816 = vmatpush2.msra.mxu0 0.0
    %817 = vmatprep.subr.mxu0 0.0
    %818 = vmatpush2.msra.mxu0 0.0
    %819 = vmatprep.subr.mxu0 0.0
    %820 = vmatpush2.msra.mxu0 0.0
    %821 = vmatprep.subr.mxu0 0.0
    %822 = vmatpush2.msra.mxu0 0.0
    %823 = vmatprep.subr.mxu0 0.0
    %824 = vmatpush2.msra.mxu0 0.0
    %825 = vmatprep.subr.mxu0 0.0
    %826 = vmatpush2.msra.mxu0 0.0
    %827 = vmatprep.subr.mxu0 0.0
    %828 = vmatpush2.msra.mxu0 0.0
    %829 = vmatprep.subr.mxu0 0.0
    %830 = vmatpush2.msra.mxu0 0.0
    %831 = vmatprep.mubr.f32.mxu0 0.0
    %832 = vmatmul.mubr.f32.gmra.mxu0 %v680
    %v833 = vpop.f32.mrf.mxu0
    %v834 = vadd.f32 0.0, %v833
    %v835 = vpop.f32.mrf.mxu0
    %836 = vdwg.mxu0
    %v837 = vadd.f32 %v693, %v763
    %v838 = vmul.f32 %v837, 0.5
    %v839 = vtanh.pop %v838
    %v840 = vmul.f32 %v839, 0.5
    %v841 = vadd.f32 %v840, 0.5
    %v842 = vadd.f32 %v694, %v765
    %v843 = vmul.f32 %v842, 0.5
    %v844 = vtanh.pop %v843
    %v845 = vmul.f32 %v844, 0.5
    %v846 = vadd.f32 %v845, 0.5
    %v847 = vadd.f32 %v834, %v500
    %v848 = vmul.f32 %v841, %v847
    %v849 = vadd.f32 %v695, %v848
    %v850 = vtanh.pop %v849
    %v851 = vsub.f32 1.0, %v846
    %v852 = vmul.f32 %v851, %v850
    %v853 = vmul.f32 %v846, %v680
    %v854 = vadd.f32 %v852, %v853
    %v855 = vrot.slane %v198, 3
    %v856 = vrot.slane %v200, 3
    %v857 = vrot.slane %v275, 3
    %v861 = vrot.slane %v204, 2
    %v862 = vrot.slane %v206, 2
    %v863 = vrot.slane %v280, 2
    %v867 = vsel %vm341, %v855, %v861
    %v868 = vsel %vm341, %v856, %v862
    %v869 = vsel %vm341, %v857, %v863
    %870 = vmatprep.subr.mxu0 %v329
    %871 = vmatpush1.msra.mxu0 %v328
    %872 = vmatprep.subr.mxu0 %v326
    %873 = vmatpush1.msra.mxu0 %v325
    %874 = vmatprep.subr.mxu0 %v323
    %875 = vmatpush1.msra.mxu0 %v322
    %876 = vmatprep.subr.mxu0 %v320
    %877 = vmatpush1.msra.mxu0 %v319
    %878 = vmatprep.subr.mxu0 %v317
    %879 = vmatpush1.msra.mxu0 %v316
    %880 = vmatprep.subr.mxu0 %v314
    %881 = vmatpush1.msra.mxu0 %v313
    %882 = vmatprep.subr.mxu0 %v311
    %883 = vmatpush1.msra.mxu0 %v310
    %884 = vmatprep.subr.mxu0 %v308
    %885 = vmatpush1.msra.mxu0 %v307
    %886 = vmatprep.subr.mxu0 %v305
    %887 = vmatpush1.msra.mxu0 %v304
    %888 = vmatprep.subr.mxu0 %v302
    %889 = vmatpush1.msra.mxu0 %v301
    %890 = vmatprep.subr.mxu0 %v299
    %891 = vmatpush1.msra.mxu0 %v298
    %892 = vmatprep.subr.mxu0 %v296
    %893 = vmatpush1.msra.mxu0 %v295
    %894 = vmatprep.subr.mxu0 %v293
    %895 = vmatpush1.msra.mxu0 %v292
    %896 = vmatprep.subr.mxu0 %v290
    %897 = vmatpush1.msra.mxu0 %v289
    %898 = vmatprep.subr.mxu0 %v287
    %899 = vmatpush1.msra.mxu0 %v286
    %900 = vmatprep.subr.mxu0 %v284
    %901 = vmatpush1.msra.mxu0 %v283
    %902 = vmatprep.subr.mxu0 0.0
    %903 = vmatpush2.msra.mxu0 0.0
    %904 = vmatprep.subr.mxu0 0.0
    %905 = vmatpush2.msra.mxu0 0.0
    %906 = vmatprep.subr.mxu0 0.0
    %907 = vmatpush2.msra.mxu0 0.0
    %908 = vmatprep.subr.mxu0 0.0
    %909 = vmatpush2.msra.mxu0 0.0
    %910 = vmatprep.subr.mxu0 0.0
    %911 = vmatpush2.msra.mxu0 0.0
    %912 = vmatprep.subr.mxu0 0.0
    %913 = vmatpush2.msra.mxu0 0.0
    %914 = vmatprep.subr.mxu0 0.0
    %915 = vmatpush2.msra.mxu0 0.0
    %916 = vmatprep.subr.mxu0 0.0
    %917 = vmatpush2.msra.mxu0 0.0
    %918 = vmatprep.subr.mxu0 0.0
    %919 = vmatpush2.msra.mxu0 0.0
    %920 = vmatprep.subr.mxu0 0.0
    %921 = vmatpush2.msra.mxu0 0.0
    %922 = vmatprep.subr.mxu0 0.0
    %923 = vmatpush2.msra.mxu0 0.0
    %924 = vmatprep.subr.mxu0 0.0
    %925 = vmatpush2.msra.mxu0 0.0
    %926 = vmatprep.subr.mxu0 0.0
    %927 = vmatpush2.msra.mxu0 0.0
    %928 = vmatprep.subr.mxu0 0.0
    %929 = vmatpush2.msra.mxu0 0.0
    %930 = vmatprep.subr.mxu0 0.0
    %931 = vmatpush2.msra.mxu0 0.0
    %932 = vmatprep.subr.mxu0 0.0
    %933 = vmatpush2.msra.mxu0 0.0
    %934 = vmatprep.mubr.f32.mxu0 0.0
    %935 = vmatmul.mubr.f32.gmra.mxu0 %v854
    %v936 = vpop.f32.mrf.mxu0
    %v937 = vadd.f32 0.0, %v936
    %v938 = vpop.f32.mrf.mxu0
    %v939 = vadd.f32 0.0, %v938
    %940 = vdwg.mxu0
    %941 = vmatprep.subr.mxu0 0.0
    %942 = vmatpush1.msra.mxu0 %v330
    %943 = vmatprep.subr.mxu0 0.0
    %944 = vmatpush1.msra.mxu0 %v327
    %945 = vmatprep.subr.mxu0 0.0
    %946 = vmatpush1.msra.mxu0 %v324
    %947 = vmatprep.subr.mxu0 0.0
    %948 = vmatpush1.msra.mxu0 %v321
    %949 = vmatprep.subr.mxu0 0.0
    %950 = vmatpush1.msra.mxu0 %v318
    %951 = vmatprep.subr.mxu0 0.0
    %952 = vmatpush1.msra.mxu0 %v315
    %953 = vmatprep.subr.mxu0 0.0
    %954 = vmatpush1.msra.mxu0 %v312
    %955 = vmatprep.subr.mxu0 0.0
    %956 = vmatpush1.msra.mxu0 %v309
    %957 = vmatprep.subr.mxu0 0.0
    %958 = vmatpush1.msra.mxu0 %v306
    %959 = vmatprep.subr.mxu0 0.0
    %960 = vmatpush1.msra.mxu0 %v303
    %961 = vmatprep.subr.mxu0 0.0
    %962 = vmatpush1.msra.mxu0 %v300
    %963 = vmatprep.subr.mxu0 0.0
    %964 = vmatpush1.msra.mxu0 %v297
    %965 = vmatprep.subr.mxu0 0.0
    %966 = vmatpush1.msra.mxu0 %v294
    %967 = vmatprep.subr.mxu0 0.0
    %968 = vmatpush1.msra.mxu0 %v291
    %969 = vmatprep.subr.mxu0 0.0
    %970 = vmatpush1.msra.mxu0 %v288
    %971 = vmatprep.subr.mxu0 0.0
    %972 = vmatpush1.msra.mxu0 %v285
    %973 = vmatprep.subr.mxu0 0.0
    %974 = vmatpush2.msra.mxu0 0.0
    %975 = vmatprep.subr.mxu0 0.0
    %976 = vmatpush2.msra.mxu0 0.0
    %977 = vmatprep.subr.mxu0 0.0
    %978 = vmatpush2.msra.mxu0 0.0
    %979 = vmatprep.subr.mxu0 0.0
    %980 = vmatpush2.msra.mxu0 0.0
    %981 = vmatprep.subr.mxu0 0.0
    %982 = vmatpush2.msra.mxu0 0.0
    %983 = vmatprep.subr.mxu0 0.0
    %984 = vmatpush2.msra.mxu0 0.0
    %985 = vmatprep.subr.mxu0 0.0
    %986 = vmatpush2.msra.mxu0 0.0
    %987 = vmatprep.subr.mxu0 0.0
    %988 = vmatpush2.msra.mxu0 0.0
    %989 = vmatprep.subr.mxu0 0.0
    %990 = vmatpush2.msra.mxu0 0.0
    %991 = vmatprep.subr.mxu0 0.0
    %992 = vmatpush2.msra.mxu0 0.0
    %993 = vmatprep.subr.mxu0 0.0
    %994 = vmatpush2.msra.mxu0 0.0
    %995 = vmatprep.subr.mxu0 0.0
    %996 = vmatpush2.msra.mxu0 0.0
    %997 = vmatprep.subr.mxu0 0.0
    %998 = vmatpush2.msra.mxu0 0.0
    %999 = vmatprep.subr.mxu0 0.0
    %1000 = vmatpush2.msra.mxu0 0.0
    %1001 = vmatprep.subr.mxu0 0.0
    %1002 = vmatpush2.msra.mxu0 0.0
    %1003 = vmatprep.subr.mxu0 0.0
    %1004 = vmatpush2.msra.mxu0 0.0
    %1005 = vmatprep.mubr.f32.mxu0 0.0
    %1006 = vmatmul.mubr.f32.gmra.mxu0 %v854
    %v1007 = vpop.f32.mrf.mxu0
    %v1008 = vadd.f32 0.0, %v1007
    %v1009 = vpop.f32.mrf.mxu0
    %1010 = vdwg.mxu0
    %v1011 = vadd.f32 %v867, %v937
    %v1012 = vmul.f32 %v1011, 0.5
    %v1013 = vtanh.pop %v1012
    %v1014 = vmul.f32 %v1013, 0.5
    %v1015 = vadd.f32 %v1014, 0.5
    %v1016 = vadd.f32 %v868, %v939
    %v1017 = vmul.f32 %v1016, 0.5
    %v1018 = vtanh.pop %v1017
    %v1019 = vmul.f32 %v1018, 0.5
    %v1020 = vadd.f32 %v1019, 0.5
    %v1021 = vadd.f32 %v1008, %v500
    %v1022 = vmul.f32 %v1015, %v1021
    %v1023 = vadd.f32 %v869, %v1022
    %v1024 = vtanh.pop %v1023
    %v1025 = vsub.f32 1.0, %v1020
    %v1026 = vmul.f32 %v1025, %v1024
    %v1027 = vmul.f32 %v1020, %v854
    %v1028 = vadd.f32 %v1026, %v1027
    %v1029 = vrot.slane %v198, 4
    %v1030 = vrot.slane %v200, 4
    %v1031 = vrot.slane %v275, 4
    %v1035 = vrot.slane %v204, 3
    %v1036 = vrot.slane %v206, 3
    %v1037 = vrot.slane %v280, 3
    %v1041 = vsel %vm341, %v1029, %v1035
    %v1042 = vsel %vm341, %v1030, %v1036
    %v1043 = vsel %vm341, %v1031, %v1037
    %1044 = vmatprep.subr.mxu0 %v329
    %1045 = vmatpush1.msra.mxu0 %v328
    %1046 = vmatprep.subr.mxu0 %v326
    %1047 = vmatpush1.msra.mxu0 %v325
    %1048 = vmatprep.subr.mxu0 %v323
    %1049 = vmatpush1.msra.mxu0 %v322
    %1050 = vmatprep.subr.mxu0 %v320
    %1051 = vmatpush1.msra.mxu0 %v319
    %1052 = vmatprep.subr.mxu0 %v317
    %1053 = vmatpush1.msra.mxu0 %v316
    %1054 = vmatprep.subr.mxu0 %v314
    %1055 = vmatpush1.msra.mxu0 %v313
    %1056 = vmatprep.subr.mxu0 %v311
    %1057 = vmatpush1.msra.mxu0 %v310
    %1058 = vmatprep.subr.mxu0 %v308
    %1059 = vmatpush1.msra.mxu0 %v307
    %1060 = vmatprep.subr.mxu0 %v305
    %1061 = vmatpush1.msra.mxu0 %v304
    %1062 = vmatprep.subr.mxu0 %v302
    %1063 = vmatpush1.msra.mxu0 %v301
    %1064 = vmatprep.subr.mxu0 %v299
    %1065 = vmatpush1.msra.mxu0 %v298
    %1066 = vmatprep.subr.mxu0 %v296
    %1067 = vmatpush1.msra.mxu0 %v295
    %1068 = vmatprep.subr.mxu0 %v293
    %1069 = vmatpush1.msra.mxu0 %v292
    %1070 = vmatprep.subr.mxu0 %v290
    %1071 = vmatpush1.msra.mxu0 %v289
    %1072 = vmatprep.subr.mxu0 %v287
    %1073 = vmatpush1.msra.mxu0 %v286
    %1074 = vmatprep.subr.mxu0 %v284
    %1075 = vmatpush1.msra.mxu0 %v283
    %1076 = vmatprep.subr.mxu0 0.0
    %1077 = vmatpush2.msra.mxu0 0.0
    %1078 = vmatprep.subr.mxu0 0.0
    %1079 = vmatpush2.msra.mxu0 0.0
    %1080 = vmatprep.subr.mxu0 0.0
    %1081 = vmatpush2.msra.mxu0 0.0
    %1082 = vmatprep.subr.mxu0 0.0
    %1083 = vmatpush2.msra.mxu0 0.0
    %1084 = vmatprep.subr.mxu0 0.0
    %1085 = vmatpush2.msra.mxu0 0.0
    %1086 = vmatprep.subr.mxu0 0.0
    %1087 = vmatpush2.msra.mxu0 0.0
    %1088 = vmatprep.subr.mxu0 0.0
    %1089 = vmatpush2.msra.mxu0 0.0
    %1090 = vmatprep.subr.mxu0 0.0
    %1091 = vmatpush2.msra.mxu0 0.0
    %1092 = vmatprep.subr.mxu0 0.0
    %1093 = vmatpush2.msra.mxu0 0.0
    %1094 = vmatprep.subr.mxu0 0.0
    %1095 = vmatpush2.msra.mxu0 0.0
    %1096 = vmatprep.subr.mxu0 0.0
    %1097 = vmatpush2.msra.mxu0 0.0
    %1098 = vmatprep.subr.mxu0 0.0
    %1099 = vmatpush2.msra.mxu0 0.0
    %1100 = vmatprep.subr.mxu0 0.0
    %1101 = vmatpush2.msra.mxu0 0.0
    %1102 = vmatprep.subr.mxu0 0.0
    %1103 = vmatpush2.msra.mxu0 0.0
    %1104 = vmatprep.subr.mxu0 0.0
    %1105 = vmatpush2.msra.mxu0 0.0
    %1106 = vmatprep.subr.mxu0 0.0
    %1107 = vmatpush2.msra.mxu0 0.0
    %1108 = vmatprep.mubr.f32.mxu0 0.0
    %1109 = vmatmul.mubr.f32.gmra.mxu0 %v1028
    %v1110 = vpop.f32.mrf.mxu0
    %v1111 = vadd.f32 0.0, %v1110
    %v1112 = vpop.f32.mrf.mxu0
    %v1113 = vadd.f32 0.0, %v1112
    %1114 = vdwg.mxu0
    %1115 = vmatprep.subr.mxu0 0.0
    %1116 = vmatpush1.msra.mxu0 %v330
    %1117 = vmatprep.subr.mxu0 0.0
    %1118 = vmatpush1.msra.mxu0 %v327
    %1119 = vmatprep.subr.mxu0 0.0
    %1120 = vmatpush1.msra.mxu0 %v324
    %1121 = vmatprep.subr.mxu0 0.0
    %1122 = vmatpush1.msra.mxu0 %v321
    %1123 = vmatprep.subr.mxu0 0.0
    %1124 = vmatpush1.msra.mxu0 %v318
    %1125 = vmatprep.subr.mxu0 0.0
    %1126 = vmatpush1.msra.mxu0 %v315
    %1127 = vmatprep.subr.mxu0 0.0
    %1128 = vmatpush1.msra.mxu0 %v312
    %1129 = vmatprep.subr.mxu0 0.0
    %1130 = vmatpush1.msra.mxu0 %v309
    %1131 = vmatprep.subr.mxu0 0.0
    %1132 = vmatpush1.msra.mxu0 %v306
    %1133 = vmatprep.subr.mxu0 0.0
    %1134 = vmatpush1.msra.mxu0 %v303
    %1135 = vmatprep.subr.mxu0 0.0
    %1136 = vmatpush1.msra.mxu0 %v300
    %1137 = vmatprep.subr.mxu0 0.0
    %1138 = vmatpush1.msra.mxu0 %v297
    %1139 = vmatprep.subr.mxu0 0.0
    %1140 = vmatpush1.msra.mxu0 %v294
    %1141 = vmatprep.subr.mxu0 0.0
    %1142 = vmatpush1.msra.mxu0 %v291
    %1143 = vmatprep.subr.mxu0 0.0
    %1144 = vmatpush1.msra.mxu0 %v288
    %1145 = vmatprep.subr.mxu0 0.0
    %1146 = vmatpush1.msra.mxu0 %v285
    %1147 = vmatprep.subr.mxu0 0.0
    %1148 = vmatpush2.msra.mxu0 0.0
    %1149 = vmatprep.subr.mxu0 0.0
    %1150 = vmatpush2.msra.mxu0 0.0
    %1151 = vmatprep.subr.mxu0 0.0
    %1152 = vmatpush2.msra.mxu0 0.0
    %1153 = vmatprep.subr.mxu0 0.0
    %1154 = vmatpush2.msra.mxu0 0.0
    %1155 = vmatprep.subr.mxu0 0.0
    %1156 = vmatpush2.msra.mxu0 0.0
    %1157 = vmatprep.subr.mxu0 0.0
    %1158 = vmatpush2.msra.mxu0 0.0
    %1159 = vmatprep.subr.mxu0 0.0
    %1160 = vmatpush2.msra.mxu0 0.0
    %1161 = vmatprep.subr.mxu0 0.0
    %1162 = vmatpush2.msra.mxu0 0.0
    %1163 = vmatprep.subr.mxu0 0.0
    %1164 = vmatpush2.msra.mxu0 0.0
    %1165 = vmatprep.subr.mxu0 0.0
    %1166 = vmatpush2.msra.mxu0 0.0
    %1167 = vmatprep.subr.mxu0 0.0
    %1168 = vmatpush2.msra.mxu0 0.0
    %1169 = vmatprep.subr.mxu0 0.0
    %1170 = vmatpush2.msra.mxu0 0.0
    %1171 = vmatprep.subr.mxu0 0.0
    %1172 = vmatpush2.msra.mxu0 0.0
    %1173 = vmatprep.subr.mxu0 0.0
    %1174 = vmatpush2.msra.mxu0 0.0
    %1175 = vmatprep.subr.mxu0 0.0
    %1176 = vmatpush2.msra.mxu0 0.0
    %1177 = vmatprep.subr.mxu0 0.0
    %1178 = vmatpush2.msra.mxu0 0.0
    %1179 = vmatprep.mubr.f32.mxu0 0.0
    %1180 = vmatmul.mubr.f32.gmra.mxu0 %v1028
    %v1181 = vpop.f32.mrf.mxu0
    %v1182 = vadd.f32 0.0, %v1181
    %v1183 = vpop.f32.mrf.mxu0
    %1184 = vdwg.mxu0
    %v1185 = vadd.f32 %v1041, %v1111
    %v1186 = vmul.f32 %v1185, 0.5
    %v1187 = vtanh.pop %v1186
    %v1188 = vmul.f32 %v1187, 0.5
    %v1189 = vadd.f32 %v1188, 0.5
    %v1190 = vadd.f32 %v1042, %v1113
    %v1191 = vmul.f32 %v1190, 0.5
    %v1192 = vtanh.pop %v1191
    %v1193 = vmul.f32 %v1192, 0.5
    %v1194 = vadd.f32 %v1193, 0.5
    %v1195 = vadd.f32 %v1182, %v500
    %v1196 = vmul.f32 %v1189, %v1195
    %v1197 = vadd.f32 %v1043, %v1196
    %v1198 = vtanh.pop %v1197
    %v1199 = vsub.f32 1.0, %v1194
    %v1200 = vmul.f32 %v1199, %v1198
    %v1201 = vmul.f32 %v1194, %v1028
    %v1202 = vadd.f32 %v1200, %v1201
    %v1203 = vrot.slane %v198, 5
    %v1204 = vrot.slane %v200, 5
    %v1205 = vrot.slane %v275, 5
    %v1209 = vrot.slane %v204, 4
    %v1210 = vrot.slane %v206, 4
    %v1211 = vrot.slane %v280, 4
    %v1215 = vsel %vm341, %v1203, %v1209
    %v1216 = vsel %vm341, %v1204, %v1210
    %v1217 = vsel %vm341, %v1205, %v1211
    %1218 = vmatprep.subr.mxu0 %v329
    %1219 = vmatpush1.msra.mxu0 %v328
    %1220 = vmatprep.subr.mxu0 %v326
    %1221 = vmatpush1.msra.mxu0 %v325
    %1222 = vmatprep.subr.mxu0 %v323
    %1223 = vmatpush1.msra.mxu0 %v322
    %1224 = vmatprep.subr.mxu0 %v320
    %1225 = vmatpush1.msra.mxu0 %v319
    %1226 = vmatprep.subr.mxu0 %v317
    %1227 = vmatpush1.msra.mxu0 %v316
    %1228 = vmatprep.subr.mxu0 %v314
    %1229 = vmatpush1.msra.mxu0 %v313
    %1230 = vmatprep.subr.mxu0 %v311
    %1231 = vmatpush1.msra.mxu0 %v310
    %1232 = vmatprep.subr.mxu0 %v308
    %1233 = vmatpush1.msra.mxu0 %v307
    %1234 = vmatprep.subr.mxu0 %v305
    %1235 = vmatpush1.msra.mxu0 %v304
    %1236 = vmatprep.subr.mxu0 %v302
    %1237 = vmatpush1.msra.mxu0 %v301
    %1238 = vmatprep.subr.mxu0 %v299
    %1239 = vmatpush1.msra.mxu0 %v298
    %1240 = vmatprep.subr.mxu0 %v296
    %1241 = vmatpush1.msra.mxu0 %v295
    %1242 = vmatprep.subr.mxu0 %v293
    %1243 = vmatpush1.msra.mxu0 %v292
    %1244 = vmatprep.subr.mxu0 %v290
    %1245 = vmatpush1.msra.mxu0 %v289
    %1246 = vmatprep.subr.mxu0 %v287
    %1247 = vmatpush1.msra.mxu0 %v286
    %1248 = vmatprep.subr.mxu0 %v284
    %1249 = vmatpush1.msra.mxu0 %v283
    %1250 = vmatprep.subr.mxu0 0.0
    %1251 = vmatpush2.msra.mxu0 0.0
    %1252 = vmatprep.subr.mxu0 0.0
    %1253 = vmatpush2.msra.mxu0 0.0
    %1254 = vmatprep.subr.mxu0 0.0
    %1255 = vmatpush2.msra.mxu0 0.0
    %1256 = vmatprep.subr.mxu0 0.0
    %1257 = vmatpush2.msra.mxu0 0.0
    %1258 = vmatprep.subr.mxu0 0.0
    %1259 = vmatpush2.msra.mxu0 0.0
    %1260 = vmatprep.subr.mxu0 0.0
    %1261 = vmatpush2.msra.mxu0 0.0
    %1262 = vmatprep.subr.mxu0 0.0
    %1263 = vmatpush2.msra.mxu0 0.0
    %1264 = vmatprep.subr.mxu0 0.0
    %1265 = vmatpush2.msra.mxu0 0.0
    %1266 = vmatprep.subr.mxu0 0.0
    %1267 = vmatpush2.msra.mxu0 0.0
    %1268 = vmatprep.subr.mxu0 0.0
    %1269 = vmatpush2.msra.mxu0 0.0
    %1270 = vmatprep.subr.mxu0 0.0
    %1271 = vmatpush2.msra.mxu0 0.0
    %1272 = vmatprep.subr.mxu0 0.0
    %1273 = vmatpush2.msra.mxu0 0.0
    %1274 = vmatprep.subr.mxu0 0.0
    %1275 = vmatpush2.msra.mxu0 0.0
    %1276 = vmatprep.subr.mxu0 0.0
    %1277 = vmatpush2.msra.mxu0 0.0
    %1278 = vmatprep.subr.mxu0 0.0
    %1279 = vmatpush2.msra.mxu0 0.0
    %1280 = vmatprep.subr.mxu0 0.0
    %1281 = vmatpush2.msra.mxu0 0.0
    %1282 = vmatprep.mubr.f32.mxu0 0.0
    %1283 = vmatmul.mubr.f32.gmra.mxu0 %v1202
    %v1284 = vpop.f32.mrf.mxu0
    %v1285 = vadd.f32 0.0, %v1284
    %v1286 = vpop.f32.mrf.mxu0
    %v1287 = vadd.f32 0.0, %v1286
    %1288 = vdwg.mxu0
    %1289 = vmatprep.subr.mxu0 0.0
    %1290 = vmatpush1.msra.mxu0 %v330
    %1291 = vmatprep.subr.mxu0 0.0
    %1292 = vmatpush1.msra.mxu0 %v327
    %1293 = vmatprep.subr.mxu0 0.0
    %1294 = vmatpush1.msra.mxu0 %v324
    %1295 = vmatprep.subr.mxu0 0.0
    %1296 = vmatpush1.msra.mxu0 %v321
    %1297 = vmatprep.subr.mxu0 0.0
    %1298 = vmatpush1.msra.mxu0 %v318
    %1299 = vmatprep.subr.mxu0 0.0
    %1300 = vmatpush1.msra.mxu0 %v315
    %1301 = vmatprep.subr.mxu0 0.0
    %1302 = vmatpush1.msra.mxu0 %v312
    %1303 = vmatprep.subr.mxu0 0.0
    %1304 = vmatpush1.msra.mxu0 %v309
    %1305 = vmatprep.subr.mxu0 0.0
    %1306 = vmatpush1.msra.mxu0 %v306
    %1307 = vmatprep.subr.mxu0 0.0
    %1308 = vmatpush1.msra.mxu0 %v303
    %1309 = vmatprep.subr.mxu0 0.0
    %1310 = vmatpush1.msra.mxu0 %v300
    %1311 = vmatprep.subr.mxu0 0.0
    %1312 = vmatpush1.msra.mxu0 %v297
    %1313 = vmatprep.subr.mxu0 0.0
    %1314 = vmatpush1.msra.mxu0 %v294
    %1315 = vmatprep.subr.mxu0 0.0
    %1316 = vmatpush1.msra.mxu0 %v291
    %1317 = vmatprep.subr.mxu0 0.0
    %1318 = vmatpush1.msra.mxu0 %v288
    %1319 = vmatprep.subr.mxu0 0.0
    %1320 = vmatpush1.msra.mxu0 %v285
    %1321 = vmatprep.subr.mxu0 0.0
    %1322 = vmatpush2.msra.mxu0 0.0
    %1323 = vmatprep.subr.mxu0 0.0
    %1324 = vmatpush2.msra.mxu0 0.0
    %1325 = vmatprep.subr.mxu0 0.0
    %1326 = vmatpush2.msra.mxu0 0.0
    %1327 = vmatprep.subr.mxu0 0.0
    %1328 = vmatpush2.msra.mxu0 0.0
    %1329 = vmatprep.subr.mxu0 0.0
    %1330 = vmatpush2.msra.mxu0 0.0
    %1331 = vmatprep.subr.mxu0 0.0
    %1332 = vmatpush2.msra.mxu0 0.0
    %1333 = vmatprep.subr.mxu0 0.0
    %1334 = vmatpush2.msra.mxu0 0.0
    %1335 = vmatprep.subr.mxu0 0.0
    %1336 = vmatpush2.msra.mxu0 0.0
    %1337 = vmatprep.subr.mxu0 0.0
    %1338 = vmatpush2.msra.mxu0 0.0
    %1339 = vmatprep.subr.mxu0 0.0
    %1340 = vmatpush2.msra.mxu0 0.0
    %1341 = vmatprep.subr.mxu0 0.0
    %1342 = vmatpush2.msra.mxu0 0.0
    %1343 = vmatprep.subr.mxu0 0.0
    %1344 = vmatpush2.msra.mxu0 0.0
    %1345 = vmatprep.subr.mxu0 0.0
    %1346 = vmatpush2.msra.mxu0 0.0
    %1347 = vmatprep.subr.mxu0 0.0
    %1348 = vmatpush2.msra.mxu0 0.0
    %1349 = vmatprep.subr.mxu0 0.0
    %1350 = vmatpush2.msra.mxu0 0.0
    %1351 = vmatprep.subr.mxu0 0.0
    %1352 = vmatpush2.msra.mxu0 0.0
    %1353 = vmatprep.mubr.f32.mxu0 0.0
    %1354 = vmatmul.mubr.f32.gmra.mxu0 %v1202
    %v1355 = vpop.f32.mrf.mxu0
    %v1356 = vadd.f32 0.0, %v1355
    %v1357 = vpop.f32.mrf.mxu0
    %1358 = vdwg.mxu0
    %v1359 = vadd.f32 %v1215, %v1285
    %v1360 = vmul.f32 %v1359, 0.5
    %v1361 = vtanh.pop %v1360
    %v1362 = vmul.f32 %v1361, 0.5
    %v1363 = vadd.f32 %v1362, 0.5
    %v1364 = vadd.f32 %v1216, %v1287
    %v1365 = vmul.f32 %v1364, 0.5
    %v1366 = vtanh.pop %v1365
    %v1367 = vmul.f32 %v1366, 0.5
    %v1368 = vadd.f32 %v1367, 0.5
    %v1369 = vadd.f32 %v1356, %v500
    %v1370 = vmul.f32 %v1363, %v1369
    %v1371 = vadd.f32 %v1217, %v1370
    %v1372 = vtanh.pop %v1371
    %v1373 = vsub.f32 1.0, %v1368
    %v1374 = vmul.f32 %v1373, %v1372
    %v1375 = vmul.f32 %v1368, %v1202
    %v1376 = vadd.f32 %v1374, %v1375
    %v1377 = vrot.slane %v198, 6
    %v1378 = vrot.slane %v200, 6
    %v1379 = vrot.slane %v275, 6
    %v1383 = vrot.slane %v204, 5
    %v1384 = vrot.slane %v206, 5
    %v1385 = vrot.slane %v280, 5
    %v1389 = vsel %vm341, %v1377, %v1383
    %v1390 = vsel %vm341, %v1378, %v1384
    %v1391 = vsel %vm341, %v1379, %v1385
    %1392 = vmatprep.subr.mxu0 %v329
    %1393 = vmatpush1.msra.mxu0 %v328
    %1394 = vmatprep.subr.mxu0 %v326
    %1395 = vmatpush1.msra.mxu0 %v325
    %1396 = vmatprep.subr.mxu0 %v323
    %1397 = vmatpush1.msra.mxu0 %v322
    %1398 = vmatprep.subr.mxu0 %v320
    %1399 = vmatpush1.msra.mxu0 %v319
    %1400 = vmatprep.subr.mxu0 %v317
    %1401 = vmatpush1.msra.mxu0 %v316
    %1402 = vmatprep.subr.mxu0 %v314
    %1403 = vmatpush1.msra.mxu0 %v313
    %1404 = vmatprep.subr.mxu0 %v311
    %1405 = vmatpush1.msra.mxu0 %v310
    %1406 = vmatprep.subr.mxu0 %v308
    %1407 = vmatpush1.msra.mxu0 %v307
    %1408 = vmatprep.subr.mxu0 %v305
    %1409 = vmatpush1.msra.mxu0 %v304
    %1410 = vmatprep.subr.mxu0 %v302
    %1411 = vmatpush1.msra.mxu0 %v301
    %1412 = vmatprep.subr.mxu0 %v299
    %1413 = vmatpush1.msra.mxu0 %v298
    %1414 = vmatprep.subr.mxu0 %v296
    %1415 = vmatpush1.msra.mxu0 %v295
    %1416 = vmatprep.subr.mxu0 %v293
    %1417 = vmatpush1.msra.mxu0 %v292
    %1418 = vmatprep.subr.mxu0 %v290
    %1419 = vmatpush1.msra.mxu0 %v289
    %1420 = vmatprep.subr.mxu0 %v287
    %1421 = vmatpush1.msra.mxu0 %v286
    %1422 = vmatprep.subr.mxu0 %v284
    %1423 = vmatpush1.msra.mxu0 %v283
    %1424 = vmatprep.subr.mxu0 0.0
    %1425 = vmatpush2.msra.mxu0 0.0
    %1426 = vmatprep.subr.mxu0 0.0
    %1427 = vmatpush2.msra.mxu0 0.0
    %1428 = vmatprep.subr.mxu0 0.0
    %1429 = vmatpush2.msra.mxu0 0.0
    %1430 = vmatprep.subr.mxu0 0.0
    %1431 = vmatpush2.msra.mxu0 0.0
    %1432 = vmatprep.subr.mxu0 0.0
    %1433 = vmatpush2.msra.mxu0 0.0
    %1434 = vmatprep.subr.mxu0 0.0
    %1435 = vmatpush2.msra.mxu0 0.0
    %1436 = vmatprep.subr.mxu0 0.0
    %1437 = vmatpush2.msra.mxu0 0.0
    %1438 = vmatprep.subr.mxu0 0.0
    %1439 = vmatpush2.msra.mxu0 0.0
    %1440 = vmatprep.subr.mxu0 0.0
    %1441 = vmatpush2.msra.mxu0 0.0
    %1442 = vmatprep.subr.mxu0 0.0
    %1443 = vmatpush2.msra.mxu0 0.0
    %1444 = vmatprep.subr.mxu0 0.0
    %1445 = vmatpush2.msra.mxu0 0.0
    %1446 = vmatprep.subr.mxu0 0.0
    %1447 = vmatpush2.msra.mxu0 0.0
    %1448 = vmatprep.subr.mxu0 0.0
    %1449 = vmatpush2.msra.mxu0 0.0
    %1450 = vmatprep.subr.mxu0 0.0
    %1451 = vmatpush2.msra.mxu0 0.0
    %1452 = vmatprep.subr.mxu0 0.0
    %1453 = vmatpush2.msra.mxu0 0.0
    %1454 = vmatprep.subr.mxu0 0.0
    %1455 = vmatpush2.msra.mxu0 0.0
    %1456 = vmatprep.mubr.f32.mxu0 0.0
    %1457 = vmatmul.mubr.f32.gmra.mxu0 %v1376
    %v1458 = vpop.f32.mrf.mxu0
    %v1459 = vadd.f32 0.0, %v1458
    %v1460 = vpop.f32.mrf.mxu0
    %v1461 = vadd.f32 0.0, %v1460
    %1462 = vdwg.mxu0
    %1463 = vmatprep.subr.mxu0 0.0
    %1464 = vmatpush1.msra.mxu0 %v330
    %1465 = vmatprep.subr.mxu0 0.0
    %1466 = vmatpush1.msra.mxu0 %v327
    %1467 = vmatprep.subr.mxu0 0.0
    %1468 = vmatpush1.msra.mxu0 %v324
    %1469 = vmatprep.subr.mxu0 0.0
    %1470 = vmatpush1.msra.mxu0 %v321
    %1471 = vmatprep.subr.mxu0 0.0
    %1472 = vmatpush1.msra.mxu0 %v318
    %1473 = vmatprep.subr.mxu0 0.0
    %1474 = vmatpush1.msra.mxu0 %v315
    %1475 = vmatprep.subr.mxu0 0.0
    %1476 = vmatpush1.msra.mxu0 %v312
    %1477 = vmatprep.subr.mxu0 0.0
    %1478 = vmatpush1.msra.mxu0 %v309
    %1479 = vmatprep.subr.mxu0 0.0
    %1480 = vmatpush1.msra.mxu0 %v306
    %1481 = vmatprep.subr.mxu0 0.0
    %1482 = vmatpush1.msra.mxu0 %v303
    %1483 = vmatprep.subr.mxu0 0.0
    %1484 = vmatpush1.msra.mxu0 %v300
    %1485 = vmatprep.subr.mxu0 0.0
    %1486 = vmatpush1.msra.mxu0 %v297
    %1487 = vmatprep.subr.mxu0 0.0
    %1488 = vmatpush1.msra.mxu0 %v294
    %1489 = vmatprep.subr.mxu0 0.0
    %1490 = vmatpush1.msra.mxu0 %v291
    %1491 = vmatprep.subr.mxu0 0.0
    %1492 = vmatpush1.msra.mxu0 %v288
    %1493 = vmatprep.subr.mxu0 0.0
    %1494 = vmatpush1.msra.mxu0 %v285
    %1495 = vmatprep.subr.mxu0 0.0
    %1496 = vmatpush2.msra.mxu0 0.0
    %1497 = vmatprep.subr.mxu0 0.0
    %1498 = vmatpush2.msra.mxu0 0.0
    %1499 = vmatprep.subr.mxu0 0.0
    %1500 = vmatpush2.msra.mxu0 0.0
    %1501 = vmatprep.subr.mxu0 0.0
    %1502 = vmatpush2.msra.mxu0 0.0
    %1503 = vmatprep.subr.mxu0 0.0
    %1504 = vmatpush2.msra.mxu0 0.0
    %1505 = vmatprep.subr.mxu0 0.0
    %1506 = vmatpush2.msra.mxu0 0.0
    %1507 = vmatprep.subr.mxu0 0.0
    %1508 = vmatpush2.msra.mxu0 0.0
    %1509 = vmatprep.subr.mxu0 0.0
    %1510 = vmatpush2.msra.mxu0 0.0
    %1511 = vmatprep.subr.mxu0 0.0
    %1512 = vmatpush2.msra.mxu0 0.0
    %1513 = vmatprep.subr.mxu0 0.0
    %1514 = vmatpush2.msra.mxu0 0.0
    %1515 = vmatprep.subr.mxu0 0.0
    %1516 = vmatpush2.msra.mxu0 0.0
    %1517 = vmatprep.subr.mxu0 0.0
    %1518 = vmatpush2.msra.mxu0 0.0
    %1519 = vmatprep.subr.mxu0 0.0
    %1520 = vmatpush2.msra.mxu0 0.0
    %1521 = vmatprep.subr.mxu0 0.0
    %1522 = vmatpush2.msra.mxu0 0.0
    %1523 = vmatprep.subr.mxu0 0.0
    %1524 = vmatpush2.msra.mxu0 0.0
    %1525 = vmatprep.subr.mxu0 0.0
    %1526 = vmatpush2.msra.mxu0 0.0
    %1527 = vmatprep.mubr.f32.mxu0 0.0
    %1528 = vmatmul.mubr.f32.gmra.mxu0 %v1376
    %v1529 = vpop.f32.mrf.mxu0
    %v1530 = vadd.f32 0.0, %v1529
    %v1531 = vpop.f32.mrf.mxu0
    %1532 = vdwg.mxu0
    %v1533 = vadd.f32 %v1389, %v1459
    %v1534 = vmul.f32 %v1533, 0.5
    %v1535 = vtanh.pop %v1534
    %v1536 = vmul.f32 %v1535, 0.5
    %v1537 = vadd.f32 %v1536, 0.5
    %v1538 = vadd.f32 %v1390, %v1461
    %v1539 = vmul.f32 %v1538, 0.5
    %v1540 = vtanh.pop %v1539
    %v1541 = vmul.f32 %v1540, 0.5
    %v1542 = vadd.f32 %v1541, 0.5
    %v1543 = vadd.f32 %v1530, %v500
    %v1544 = vmul.f32 %v1537, %v1543
    %v1545 = vadd.f32 %v1391, %v1544
    %v1546 = vtanh.pop %v1545
    %v1547 = vsub.f32 1.0, %v1542
    %v1548 = vmul.f32 %v1547, %v1546
    %v1549 = vmul.f32 %v1542, %v1376
    %v1550 = vadd.f32 %v1548, %v1549
    %v1551 = vrot.slane %v198, 7
    %v1552 = vrot.slane %v200, 7
    %v1553 = vrot.slane %v275, 7
    %v1557 = vrot.slane %v204, 6
    %v1558 = vrot.slane %v206, 6
    %v1559 = vrot.slane %v280, 6
    %v1563 = vsel %vm341, %v1551, %v1557
    %v1564 = vsel %vm341, %v1552, %v1558
    %v1565 = vsel %vm341, %v1553, %v1559
    %1566 = vmatprep.subr.mxu0 %v329
    %1567 = vmatpush1.msra.mxu0 %v328
    %1568 = vmatprep.subr.mxu0 %v326
    %1569 = vmatpush1.msra.mxu0 %v325
    %1570 = vmatprep.subr.mxu0 %v323
    %1571 = vmatpush1.msra.mxu0 %v322
    %1572 = vmatprep.subr.mxu0 %v320
    %1573 = vmatpush1.msra.mxu0 %v319
    %1574 = vmatprep.subr.mxu0 %v317
    %1575 = vmatpush1.msra.mxu0 %v316
    %1576 = vmatprep.subr.mxu0 %v314
    %1577 = vmatpush1.msra.mxu0 %v313
    %1578 = vmatprep.subr.mxu0 %v311
    %1579 = vmatpush1.msra.mxu0 %v310
    %1580 = vmatprep.subr.mxu0 %v308
    %1581 = vmatpush1.msra.mxu0 %v307
    %1582 = vmatprep.subr.mxu0 %v305
    %1583 = vmatpush1.msra.mxu0 %v304
    %1584 = vmatprep.subr.mxu0 %v302
    %1585 = vmatpush1.msra.mxu0 %v301
    %1586 = vmatprep.subr.mxu0 %v299
    %1587 = vmatpush1.msra.mxu0 %v298
    %1588 = vmatprep.subr.mxu0 %v296
    %1589 = vmatpush1.msra.mxu0 %v295
    %1590 = vmatprep.subr.mxu0 %v293
    %1591 = vmatpush1.msra.mxu0 %v292
    %1592 = vmatprep.subr.mxu0 %v290
    %1593 = vmatpush1.msra.mxu0 %v289
    %1594 = vmatprep.subr.mxu0 %v287
    %1595 = vmatpush1.msra.mxu0 %v286
    %1596 = vmatprep.subr.mxu0 %v284
    %1597 = vmatpush1.msra.mxu0 %v283
    %1598 = vmatprep.subr.mxu0 0.0
    %1599 = vmatpush2.msra.mxu0 0.0
    %1600 = vmatprep.subr.mxu0 0.0
    %1601 = vmatpush2.msra.mxu0 0.0
    %1602 = vmatprep.subr.mxu0 0.0
    %1603 = vmatpush2.msra.mxu0 0.0
    %1604 = vmatprep.subr.mxu0 0.0
    %1605 = vmatpush2.msra.mxu0 0.0
    %1606 = vmatprep.subr.mxu0 0.0
    %1607 = vmatpush2.msra.mxu0 0.0
    %1608 = vmatprep.subr.mxu0 0.0
    %1609 = vmatpush2.msra.mxu0 0.0
    %1610 = vmatprep.subr.mxu0 0.0
    %1611 = vmatpush2.msra.mxu0 0.0
    %1612 = vmatprep.subr.mxu0 0.0
    %1613 = vmatpush2.msra.mxu0 0.0
    %1614 = vmatprep.subr.mxu0 0.0
    %1615 = vmatpush2.msra.mxu0 0.0
    %1616 = vmatprep.subr.mxu0 0.0
    %1617 = vmatpush2.msra.mxu0 0.0
    %1618 = vmatprep.subr.mxu0 0.0
    %1619 = vmatpush2.msra.mxu0 0.0
    %1620 = vmatprep.subr.mxu0 0.0
    %1621 = vmatpush2.msra.mxu0 0.0
    %1622 = vmatprep.subr.mxu0 0.0
    %1623 = vmatpush2.msra.mxu0 0.0
    %1624 = vmatprep.subr.mxu0 0.0
    %1625 = vmatpush2.msra.mxu0 0.0
    %1626 = vmatprep.subr.mxu0 0.0
    %1627 = vmatpush2.msra.mxu0 0.0
    %1628 = vmatprep.subr.mxu0 0.0
    %1629 = vmatpush2.msra.mxu0 0.0
    %1630 = vmatprep.mubr.f32.mxu0 0.0
    %1631 = vmatmul.mubr.f32.gmra.mxu0 %v1550
    %v1632 = vpop.f32.mrf.mxu0
    %v1633 = vadd.f32 0.0, %v1632
    %v1634 = vpop.f32.mrf.mxu0
    %v1635 = vadd.f32 0.0, %v1634
    %1636 = vdwg.mxu0
    %1637 = vmatprep.subr.mxu0 0.0
    %1638 = vmatpush1.msra.mxu0 %v330
    %1639 = vmatprep.subr.mxu0 0.0
    %1640 = vmatpush1.msra.mxu0 %v327
    %1641 = vmatprep.subr.mxu0 0.0
    %1642 = vmatpush1.msra.mxu0 %v324
    %1643 = vmatprep.subr.mxu0 0.0
    %1644 = vmatpush1.msra.mxu0 %v321
    %1645 = vmatprep.subr.mxu0 0.0
    %1646 = vmatpush1.msra.mxu0 %v318
    %1647 = vmatprep.subr.mxu0 0.0
    %1648 = vmatpush1.msra.mxu0 %v315
    %1649 = vmatprep.subr.mxu0 0.0
    %1650 = vmatpush1.msra.mxu0 %v312
    %1651 = vmatprep.subr.mxu0 0.0
    %1652 = vmatpush1.msra.mxu0 %v309
    %1653 = vmatprep.subr.mxu0 0.0
    %1654 = vmatpush1.msra.mxu0 %v306
    %1655 = vmatprep.subr.mxu0 0.0
    %1656 = vmatpush1.msra.mxu0 %v303
    %1657 = vmatprep.subr.mxu0 0.0
    %1658 = vmatpush1.msra.mxu0 %v300
    %1659 = vmatprep.subr.mxu0 0.0
    %1660 = vmatpush1.msra.mxu0 %v297
    %1661 = vmatprep.subr.mxu0 0.0
    %1662 = vmatpush1.msra.mxu0 %v294
    %1663 = vmatprep.subr.mxu0 0.0
    %1664 = vmatpush1.msra.mxu0 %v291
    %1665 = vmatprep.subr.mxu0 0.0
    %1666 = vmatpush1.msra.mxu0 %v288
    %1667 = vmatprep.subr.mxu0 0.0
    %1668 = vmatpush1.msra.mxu0 %v285
    %1669 = vmatprep.subr.mxu0 0.0
    %1670 = vmatpush2.msra.mxu0 0.0
    %1671 = vmatprep.subr.mxu0 0.0
    %1672 = vmatpush2.msra.mxu0 0.0
    %1673 = vmatprep.subr.mxu0 0.0
    %1674 = vmatpush2.msra.mxu0 0.0
    %1675 = vmatprep.subr.mxu0 0.0
    %1676 = vmatpush2.msra.mxu0 0.0
    %1677 = vmatprep.subr.mxu0 0.0
    %1678 = vmatpush2.msra.mxu0 0.0
    %1679 = vmatprep.subr.mxu0 0.0
    %1680 = vmatpush2.msra.mxu0 0.0
    %1681 = vmatprep.subr.mxu0 0.0
    %1682 = vmatpush2.msra.mxu0 0.0
    %1683 = vmatprep.subr.mxu0 0.0
    %1684 = vmatpush2.msra.mxu0 0.0
    %1685 = vmatprep.subr.mxu0 0.0
    %1686 = vmatpush2.msra.mxu0 0.0
    %1687 = vmatprep.subr.mxu0 0.0
    %1688 = vmatpush2.msra.mxu0 0.0
    %1689 = vmatprep.subr.mxu0 0.0
    %1690 = vmatpush2.msra.mxu0 0.0
    %1691 = vmatprep.subr.mxu0 0.0
    %1692 = vmatpush2.msra.mxu0 0.0
    %1693 = vmatprep.subr.mxu0 0.0
    %1694 = vmatpush2.msra.mxu0 0.0
    %1695 = vmatprep.subr.mxu0 0.0
    %1696 = vmatpush2.msra.mxu0 0.0
    %1697 = vmatprep.subr.mxu0 0.0
    %1698 = vmatpush2.msra.mxu0 0.0
    %1699 = vmatprep.subr.mxu0 0.0
    %1700 = vmatpush2.msra.mxu0 0.0
    %1701 = vmatprep.mubr.f32.mxu0 0.0
    %1702 = vmatmul.mubr.f32.gmra.mxu0 %v1550
    %v1703 = vpop.f32.mrf.mxu0
    %v1704 = vadd.f32 0.0, %v1703
    %v1705 = vpop.f32.mrf.mxu0
    %1706 = vdwg.mxu0
    %v1707 = vadd.f32 %v1563, %v1633
    %v1708 = vmul.f32 %v1707, 0.5
    %v1709 = vtanh.pop %v1708
    %v1710 = vmul.f32 %v1709, 0.5
    %v1711 = vadd.f32 %v1710, 0.5
    %v1712 = vadd.f32 %v1564, %v1635
    %v1713 = vmul.f32 %v1712, 0.5
    %v1714 = vtanh.pop %v1713
    %v1715 = vmul.f32 %v1714, 0.5
    %v1716 = vadd.f32 %v1715, 0.5
    %v1717 = vadd.f32 %v1704, %v500
    %v1718 = vmul.f32 %v1711, %v1717
    %v1719 = vadd.f32 %v1565, %v1718
    %v1720 = vtanh.pop %v1719
    %v1721 = vsub.f32 1.0, %v1716
    %v1722 = vmul.f32 %v1721, %v1720
    %v1723 = vmul.f32 %v1716, %v1550
    %v1724 = vadd.f32 %v1722, %v1723
    %v1725 = vld [vmem:[#allocation4] sm:$0xff]
    %v1726 = vld [vmem:[#allocation4 + $0x8] sm:$0xff]
    %v1727 = vld [vmem:[#allocation4 + $0x10] sm:$0xff]
    %v1728 = vld [vmem:[#allocation4 + $0x18] sm:$0xff]
    %v1729 = vld [vmem:[#allocation4 + $0x20] sm:$0xff]
    %v1730 = vld [vmem:[#allocation4 + $0x28] sm:$0xff]
    %v1731 = vld [vmem:[#allocation4 + $0x30] sm:$0xff]
    %v1732 = vld [vmem:[#allocation4 + $0x38] sm:$0xff]
    %v1733 = vld [vmem:[#allocation4 + $0x40] sm:$0xff]
    %v1734 = vld [vmem:[#allocation4 + $0x48] sm:$0xff]
    %v1735 = vld [vmem:[#allocation4 + $0x50] sm:$0xff]
    %v1736 = vld [vmem:[#allocation4 + $0x58] sm:$0xff]
    %v1737 = vld [vmem:[#allocation4 + $0x60] sm:$0xff]
    %v1738 = vld [vmem:[#allocation4 + $0x68] sm:$0xff]
    %v1739 = vld [vmem:[#allocation4 + $0x70] sm:$0xff]
    %v1740 = vld [vmem:[#allocation4 + $0x78] sm:$0xff]
    %v1741 = vld [vmem:[%s6] sm:$0x1]
    %v1743 = vlaneseq
    %v1744 = vshrl.u32 %v1743, 7
    %v1745 = vsub.s32 0, %v1744
    %v1746 = vrot.slane %v1741, %v1745
    %1748 = vmatprep.subr.mxu0 0.0
    %1749 = vmatpush1.msra.mxu0 %v1740
    %1750 = vmatprep.subr.mxu0 0.0
    %1751 = vmatpush1.msra.mxu0 %v1739
    %1752 = vmatprep.subr.mxu0 0.0
    %1753 = vmatpush1.msra.mxu0 %v1738
    %1754 = vmatprep.subr.mxu0 0.0
    %1755 = vmatpush1.msra.mxu0 %v1737
    %1756 = vmatprep.subr.mxu0 0.0
    %1757 = vmatpush1.msra.mxu0 %v1736
    %1758 = vmatprep.subr.mxu0 0.0
    %1759 = vmatpush1.msra.mxu0 %v1735
    %1760 = vmatprep.subr.mxu0 0.0
    %1761 = vmatpush1.msra.mxu0 %v1734
    %1762 = vmatprep.subr.mxu0 0.0
    %1763 = vmatpush1.msra.mxu0 %v1733
    %1764 = vmatprep.subr.mxu0 0.0
    %1765 = vmatpush1.msra.mxu0 %v1732
    %1766 = vmatprep.subr.mxu0 0.0
    %1767 = vmatpush1.msra.mxu0 %v1731
    %1768 = vmatprep.subr.mxu0 0.0
    %1769 = vmatpush1.msra.mxu0 %v1730
    %1770 = vmatprep.subr.mxu0 0.0
    %1771 = vmatpush1.msra.mxu0 %v1729
    %1772 = vmatprep.subr.mxu0 0.0
    %1773 = vmatpush1.msra.mxu0 %v1728
    %1774 = vmatprep.subr.mxu0 0.0
    %1775 = vmatpush1.msra.mxu0 %v1727
    %1776 = vmatprep.subr.mxu0 0.0
    %1777 = vmatpush1.msra.mxu0 %v1726
    %1778 = vmatprep.subr.mxu0 0.0
    %1779 = vmatpush1.msra.mxu0 %v1725
    %1780 = vmatprep.subr.mxu0 0.0
    %1781 = vmatpush2.msra.mxu0 0.0
    %1782 = vmatprep.subr.mxu0 0.0
    %1783 = vmatpush2.msra.mxu0 0.0
    %1784 = vmatprep.subr.mxu0 0.0
    %1785 = vmatpush2.msra.mxu0 0.0
    %1786 = vmatprep.subr.mxu0 0.0
    %1787 = vmatpush2.msra.mxu0 0.0
    %1788 = vmatprep.subr.mxu0 0.0
    %1789 = vmatpush2.msra.mxu0 0.0
    %1790 = vmatprep.subr.mxu0 0.0
    %1791 = vmatpush2.msra.mxu0 0.0
    %1792 = vmatprep.subr.mxu0 0.0
    %1793 = vmatpush2.msra.mxu0 0.0
    %1794 = vmatprep.subr.mxu0 0.0
    %1795 = vmatpush2.msra.mxu0 0.0
    %1796 = vmatprep.subr.mxu0 0.0
    %1797 = vmatpush2.msra.mxu0 0.0
    %1798 = vmatprep.subr.mxu0 0.0
    %1799 = vmatpush2.msra.mxu0 0.0
    %1800 = vmatprep.subr.mxu0 0.0
    %1801 = vmatpush2.msra.mxu0 0.0
    %1802 = vmatprep.subr.mxu0 0.0
    %1803 = vmatpush2.msra.mxu0 0.0
    %1804 = vmatprep.subr.mxu0 0.0
    %1805 = vmatpush2.msra.mxu0 0.0
    %1806 = vmatprep.subr.mxu0 0.0
    %1807 = vmatpush2.msra.mxu0 0.0
    %1808 = vmatprep.subr.mxu0 0.0
    %1809 = vmatpush2.msra.mxu0 0.0
    %1810 = vmatprep.subr.mxu0 0.0
    %1811 = vmatpush2.msra.mxu0 0.0
    %1812 = vmatprep.mubr.f32.mxu0 0.0
    %1813 = vmatmul.mubr.f32.gmra.mxu0 %v1724
    %v1814 = vpop.f32.mrf.mxu0
    %v1815 = vadd.f32 %v1746, %v1814
    %v1816 = vpop.f32.mrf.mxu0
    %1817 = vdwg.mxu0
    %v1818 = vmax.f32 %v1815, 0.0
    %v1819 = vld [vmem:[#allocation6] sm:$0xff]
    %v1820 = vld [vmem:[#allocation6 + $0x8] sm:$0xff]
    %v1821 = vld [vmem:[#allocation6 + $0x10] sm:$0xff]
    %v1822 = vld [vmem:[#allocation6 + $0x18] sm:$0xff]
    %v1823 = vld [vmem:[#allocation6 + $0x20] sm:$0xff]
    %v1824 = vld [vmem:[#allocation6 + $0x28] sm:$0xff]
    %v1825 = vld [vmem:[#allocation6 + $0x30] sm:$0xff]
    %v1826 = vld [vmem:[#allocation6 + $0x38] sm:$0xff]
    %v1827 = vld [vmem:[#allocation6 + $0x40] sm:$0xff]
    %v1828 = vld [vmem:[#allocation6 + $0x48] sm:$0xff]
    %v1829 = vld [vmem:[#allocation6 + $0x50] sm:$0xff]
    %v1830 = vld [vmem:[#allocation6 + $0x58] sm:$0xff]
    %v1831 = vld [vmem:[#allocation6 + $0x60] sm:$0xff]
    %v1832 = vld [vmem:[#allocation6 + $0x68] sm:$0xff]
    %v1833 = vld [vmem:[#allocation6 + $0x70] sm:$0xff]
    %v1834 = vld [vmem:[#allocation6 + $0x78] sm:$0xff]
    %v1835 = vld [vmem:[%s8] sm:$0x1]
    %v1837 = vlaneseq
    %v1838 = vshrl.u32 %v1837, 7
    %v1839 = vsub.s32 0, %v1838
    %v1840 = vrot.slane %v1835, %v1839
    %1842 = vmatprep.subr.mxu0 0.0
    %1843 = vmatpush1.msra.mxu0 %v1834
    %1844 = vmatprep.subr.mxu0 0.0
    %1845 = vmatpush1.msra.mxu0 %v1833
    %1846 = vmatprep.subr.mxu0 0.0
    %1847 = vmatpush1.msra.mxu0 %v1832
    %1848 = vmatprep.subr.mxu0 0.0
    %1849 = vmatpush1.msra.mxu0 %v1831
    %1850 = vmatprep.subr.mxu0 0.0
    %1851 = vmatpush1.msra.mxu0 %v1830
    %1852 = vmatprep.subr.mxu0 0.0
    %1853 = vmatpush1.msra.mxu0 %v1829
    %1854 = vmatprep.subr.mxu0 0.0
    %1855 = vmatpush1.msra.mxu0 %v1828
    %1856 = vmatprep.subr.mxu0 0.0
    %1857 = vmatpush1.msra.mxu0 %v1827
    %1858 = vmatprep.subr.mxu0 0.0
    %1859 = vmatpush1.msra.mxu0 %v1826
    %1860 = vmatprep.subr.mxu0 0.0
    %1861 = vmatpush1.msra.mxu0 %v1825
    %1862 = vmatprep.subr.mxu0 0.0
    %1863 = vmatpush1.msra.mxu0 %v1824
    %1864 = vmatprep.subr.mxu0 0.0
    %1865 = vmatpush1.msra.mxu0 %v1823
    %1866 = vmatprep.subr.mxu0 0.0
    %1867 = vmatpush1.msra.mxu0 %v1822
    %1868 = vmatprep.subr.mxu0 0.0
    %1869 = vmatpush1.msra.mxu0 %v1821
    %1870 = vmatprep.subr.mxu0 0.0
    %1871 = vmatpush1.msra.mxu0 %v1820
    %1872 = vmatprep.subr.mxu0 0.0
    %1873 = vmatpush1.msra.mxu0 %v1819
    %1874 = vmatprep.subr.mxu0 0.0
    %1875 = vmatpush2.msra.mxu0 0.0
    %1876 = vmatprep.subr.mxu0 0.0
    %1877 = vmatpush2.msra.mxu0 0.0
    %1878 = vmatprep.subr.mxu0 0.0
    %1879 = vmatpush2.msra.mxu0 0.0
    %1880 = vmatprep.subr.mxu0 0.0
    %1881 = vmatpush2.msra.mxu0 0.0
    %1882 = vmatprep.subr.mxu0 0.0
    %1883 = vmatpush2.msra.mxu0 0.0
    %1884 = vmatprep.subr.mxu0 0.0
    %1885 = vmatpush2.msra.mxu0 0.0
    %1886 = vmatprep.subr.mxu0 0.0
    %1887 = vmatpush2.msra.mxu0 0.0
    %1888 = vmatprep.subr.mxu0 0.0
    %1889 = vmatpush2.msra.mxu0 0.0
    %1890 = vmatprep.subr.mxu0 0.0
    %1891 = vmatpush2.msra.mxu0 0.0
    %1892 = vmatprep.subr.mxu0 0.0
    %1893 = vmatpush2.msra.mxu0 0.0
    %1894 = vmatprep.subr.mxu0 0.0
    %1895 = vmatpush2.msra.mxu0 0.0
    %1896 = vmatprep.subr.mxu0 0.0
    %1897 = vmatpush2.msra.mxu0 0.0
    %1898 = vmatprep.subr.mxu0 0.0
    %1899 = vmatpush2.msra.mxu0 0.0
    %1900 = vmatprep.subr.mxu0 0.0
    %1901 = vmatpush2.msra.mxu0 0.0
    %1902 = vmatprep.subr.mxu0 0.0
    %1903 = vmatpush2.msra.mxu0 0.0
    %1904 = vmatprep.subr.mxu0 0.0
    %1905 = vmatpush2.msra.mxu0 0.0
    %1906 = vmatprep.mubr.f32.mxu0 0.0
    %1907 = vmatmul.mubr.f32.gmra.mxu0 %v1818
    %v1908 = vpop.f32.mrf.mxu0
    %v1909 = vadd.f32 %v1840, %v1908
    %v1910 = vpop.f32.mrf.mxu0
    %1911 = vdwg.mxu0
    %v1912 = vmax.f32 %v1909, 0.0
    %v1913 = vld [vmem:[#allocation7] sm:$0xff]
    %v1914 = vld [vmem:[#allocation7 + $0x8] sm:$0xff]
    %v1915 = vld [vmem:[#allocation7 + $0x10] sm:$0xff]
    %v1916 = vld [vmem:[#allocation7 + $0x18] sm:$0xff]
    %v1917 = vld [vmem:[#allocation7 + $0x20] sm:$0xff]
    %v1918 = vld [vmem:[#allocation7 + $0x28] sm:$0xff]
    %v1919 = vld [vmem:[#allocation7 + $0x30] sm:$0xff]
    %v1920 = vld [vmem:[#allocation7 + $0x38] sm:$0xff]
    %v1921 = vld [vmem:[#allocation7 + $0x40] sm:$0xff]
    %v1922 = vld [vmem:[#allocation7 + $0x48] sm:$0xff]
    %v1923 = vld [vmem:[#allocation7 + $0x50] sm:$0xff]
    %v1924 = vld [vmem:[#allocation7 + $0x58] sm:$0xff]
    %v1925 = vld [vmem:[#allocation7 + $0x60] sm:$0xff]
    %v1926 = vld [vmem:[#allocation7 + $0x68] sm:$0xff]
    %v1927 = vld [vmem:[#allocation7 + $0x70] sm:$0xff]
    %v1928 = vld [vmem:[#allocation7 + $0x78] sm:$0xff]
    %v1929 = vld [vmem:[%s10] sm:$0x1]
    %v1931 = vlaneseq
    %v1932 = vshrl.u32 %v1931, 7
    %v1933 = vsub.s32 0, %v1932
    %v1934 = vrot.slane %v1929, %v1933
    %1936 = vmatprep.subr.mxu0 0.0
    %1937 = vmatpush1.msra.mxu0 %v1928
    %1938 = vmatprep.subr.mxu0 0.0
    %1939 = vmatpush1.msra.mxu0 %v1927
    %1940 = vmatprep.subr.mxu0 0.0
    %1941 = vmatpush1.msra.mxu0 %v1926
    %1942 = vmatprep.subr.mxu0 0.0
    %1943 = vmatpush1.msra.mxu0 %v1925
    %1944 = vmatprep.subr.mxu0 0.0
    %1945 = vmatpush1.msra.mxu0 %v1924
    %1946 = vmatprep.subr.mxu0 0.0
    %1947 = vmatpush1.msra.mxu0 %v1923
    %1948 = vmatprep.subr.mxu0 0.0
    %1949 = vmatpush1.msra.mxu0 %v1922
    %1950 = vmatprep.subr.mxu0 0.0
    %1951 = vmatpush1.msra.mxu0 %v1921
    %1952 = vmatprep.subr.mxu0 0.0
    %1953 = vmatpush1.msra.mxu0 %v1920
    %1954 = vmatprep.subr.mxu0 0.0
    %1955 = vmatpush1.msra.mxu0 %v1919
    %1956 = vmatprep.subr.mxu0 0.0
    %1957 = vmatpush1.msra.mxu0 %v1918
    %1958 = vmatprep.subr.mxu0 0.0
    %1959 = vmatpush1.msra.mxu0 %v1917
    %1960 = vmatprep.subr.mxu0 0.0
    %1961 = vmatpush1.msra.mxu0 %v1916
    %1962 = vmatprep.subr.mxu0 0.0
    %1963 = vmatpush1.msra.mxu0 %v1915
    %1964 = vmatprep.subr.mxu0 0.0
    %1965 = vmatpush1.msra.mxu0 %v1914
    %1966 = vmatprep.subr.mxu0 0.0
    %1967 = vmatpush1.msra.mxu0 %v1913
    %1968 = vmatprep.subr.mxu0 0.0
    %1969 = vmatpush2.msra.mxu0 0.0
    %1970 = vmatprep.subr.mxu0 0.0
    %1971 = vmatpush2.msra.mxu0 0.0
    %1972 = vmatprep.subr.mxu0 0.0
    %1973 = vmatpush2.msra.mxu0 0.0
    %1974 = vmatprep.subr.mxu0 0.0
    %1975 = vmatpush2.msra.mxu0 0.0
    %1976 = vmatprep.subr.mxu0 0.0
    %1977 = vmatpush2.msra.mxu0 0.0
    %1978 = vmatprep.subr.mxu0 0.0
    %1979 = vmatpush2.msra.mxu0 0.0
    %1980 = vmatprep.subr.mxu0 0.0
    %1981 = vmatpush2.msra.mxu0 0.0
    %1982 = vmatprep.subr.mxu0 0.0
    %1983 = vmatpush2.msra.mxu0 0.0
    %1984 = vmatprep.subr.mxu0 0.0
    %1985 = vmatpush2.msra.mxu0 0.0
    %1986 = vmatprep.subr.mxu0 0.0
    %1987 = vmatpush2.msra.mxu0 0.0
    %1988 = vmatprep.subr.mxu0 0.0
    %1989 = vmatpush2.msra.mxu0 0.0
    %1990 = vmatprep.subr.mxu0 0.0
    %1991 = vmatpush2.msra.mxu0 0.0
    %1992 = vmatprep.subr.mxu0 0.0
    %1993 = vmatpush2.msra.mxu0 0.0
    %1994 = vmatprep.subr.mxu0 0.0
    %1995 = vmatpush2.msra.mxu0 0.0
    %1996 = vmatprep.subr.mxu0 0.0
    %1997 = vmatpush2.msra.mxu0 0.0
    %1998 = vmatprep.subr.mxu0 0.0
    %1999 = vmatpush2.msra.mxu0 0.0
    %2000 = vmatprep.mubr.f32.mxu0 0.0
    %2001 = vmatmul.mubr.f32.gmra.mxu0 %v1912
    %v2002 = vpop.f32.mrf.mxu0
    %v2003 = vadd.f32 %v1934, %v2002
    %v2004 = vpop.f32.mrf.mxu0
    %2005 = vdwg.mxu0
    %v2006 = vxor.u32 %v2003, 2147483648
    %v2007 = vmul.f32 %v2006, 1.442695
    %v2008 = vpow.pop %v2007
    %v2009 = vadd.f32 %v2008, 1.0
    %v2010 = vrcp.pop %v2009
    %v2011 = vmul.f32 1.0, %v2010
    %2012 = vst [vmem:[%s11] sm:$0x3] %v2011
    // Predicated region
    $region62: #{gru_mod_forward.1} parent=1 // pred_check
      _
    $region63: #{gru_mod_forward.1} parent=1 // pred_check_branch
      %2014 = sbr.rel (0) target = $region65
    $region64: #{gru_mod_forward.1} parent=1 // pred_region
      _
    $region65: #{gru_mod_forward.1} parent=1 // pred_fallthru
      _
    // Predicated region
    $region66: #{gru_mod_forward.1} parent=1 // pred_check
      _
    $region67: #{gru_mod_forward.1} parent=1 // pred_check_branch
      %2016 = sbr.rel (0) target = $region69
    $region68: #{gru_mod_forward.1} parent=1 // pred_region
      _
    $region69: #{gru_mod_forward.1} parent=1 // pred_fallthru
      _
    %2017 = vsyncpa [#allocation3], 1
    %2018 = vsyncpa [#allocation5], 1
    %2019 = vsyncpa [#allocation8], 1

</llo_original>
